<compile_context>
chip_gen: v5e
topology: v5e:2x2
jax: 0.10.0
libtpu: 0.0.40
codegen_flags: <defaults>
</compile_context>

<pallas_src>
import functools
import math

import jax
import jax.numpy as jnp
from jax.experimental import pallas as pl
from jax.experimental.pallas import tpu as pltpu


# ----------------------------------------------------------------------------- kernels
def gru_seq_kernel(gi_ref, h0_ref, whh_ref, bhn_ref, hs_ref, h_scr, *, tc, hidden):
    """One time-chunk (TC steps) of the fused GRU recurrence (grid axis 0 == time chunk).

    gi_ref  : (TC, B, 3H) f32   precomputed x@Wih + folded biases for this chunk
    h0_ref  : (B, H)      f32   initial hidden state (read only at chunk == 0)
    whh_ref : (H, 3H)     bf16  fused hidden->hidden weights, gate order [r, z, n]
    bhn_ref : (1, H)      f32   hidden->hidden bias of the 'new' gate (inside r*(.))
    hs_ref  : (TC, B, H)  f32   output hidden states for this chunk
    h_scr   : (B, H)      f32   VMEM scratch carrying h across grid steps
    """
    c = pl.program_id(0)

    @pl.when(c == 0)
    def _():
        h_scr[...] = h0_ref[...]

    h = h_scr[...]                                        # (B, H) f32
    H = hidden

    # Static (fully unrolled) loop over the TC timesteps of this chunk.
    for i in range(tc):
        # Single fused MXU push: (B, H) x (H, 3H) in bf16, accumulate in f32.
        gh = jnp.dot(h.astype(jnp.bfloat16), whh_ref[...],
                     preferred_element_type=jnp.float32)  # (B, 3H)
        gi = gi_ref[i]                                    # (B, 3H)

        r = jax.nn.sigmoid(gi[:, 0 * H:1 * H] + gh[:, 0 * H:1 * H])
        z = jax.nn.sigmoid(gi[:, 1 * H:2 * H] + gh[:, 1 * H:2 * H])
        n = jnp.tanh(gi[:, 2 * H:3 * H] + r * (gh[:, 2 * H:3 * H] + bhn_ref[...]))
        h = n + z * (h - n)                               # == (1-z)*n + z*h

        hs_ref[i] = h

    h_scr[...] = h


def matmul_bias_kernel(x_ref, w_ref, b_ref, o_ref):
    """o = x @ W + b   (x cast to bf16, W stored bf16, f32 accumulate)."""
    x = x_ref[...].astype(jnp.bfloat16)
    o_ref[...] = (jnp.dot(x, w_ref[...], preferred_element_type=jnp.float32)
                  + b_ref[...])


def proj_logsoftmax_kernel(h_ref, w_ref, b_ref, out_ref):
    """out = log_softmax(h @ W + b) along the last axis (full vocab per block)."""
    h = h_ref[...].astype(jnp.bfloat16)
    logits = jnp.dot(h, w_ref[...], preferred_element_type=jnp.float32) + b_ref[...]
    m = jnp.max(logits, axis=-1, keepdims=True)
    shifted = logits - m
    lse = jnp.log(jnp.sum(jnp.exp(shifted), axis=-1, keepdims=True))
    out_ref[...] = shifted - lse


# ----------------------------------------------------------------------------- wrappers
def _row_tile(n, cap=128):
    """Largest multiple of 8 that divides n (capped); fallback to full extent."""
    start = (min(cap, n) // 8) * 8
    for t in range(start, 7, -8):
        if n % t == 0:
            return t
    return n


def _time_chunk(t, cap=8):
    """Largest chunk <= cap that divides T (static unroll budget per grid step)."""
    for c in range(min(cap, t), 0, -1):
        if t % c == 0:
            return c
    return 1


def matmul_bias(x, w, b):
    n, k = x.shape
    m = w.shape[1]
    tr = _row_tile(n)
    return pl.pallas_call(
        matmul_bias_kernel,
        out_shape=jax.ShapeDtypeStruct((n, m), jnp.float32),
        grid_spec=pltpu.PrefetchScalarGridSpec(
            num_scalar_prefetch=0,
            grid=(n // tr,),
            in_specs=[pl.BlockSpec((tr, k), lambda i: (i, 0)),
                      pl.BlockSpec((k, m), lambda i: (0, 0)),   # weight resident
                      pl.BlockSpec((1, m), lambda i: (0, 0))],
            out_specs=pl.BlockSpec((tr, m), lambda i: (i, 0))),
        compiler_params=pltpu.CompilerParams(dimension_semantics=("parallel",)),
    )(x, w, b)


def project_log_softmax(hs_flat, w_out, b_out):
    n, h = hs_flat.shape
    v = w_out.shape[1]
    tr = _row_tile(n)
    return pl.pallas_call(
        proj_logsoftmax_kernel,
        out_shape=jax.ShapeDtypeStruct((n, v), jnp.float32),
        grid_spec=pltpu.PrefetchScalarGridSpec(
            num_scalar_prefetch=0,
            grid=(n // tr,),
            in_specs=[pl.BlockSpec((tr, h), lambda i: (i, 0)),
                      pl.BlockSpec((h, v), lambda i: (0, 0)),   # weight resident
                      pl.BlockSpec((1, v), lambda i: (0, 0))],
            out_specs=pl.BlockSpec((tr, v), lambda i: (i, 0))),
        compiler_params=pltpu.CompilerParams(dimension_semantics=("parallel",)),
    )(hs_flat, w_out, b_out)


def gru_seq(gi_tbg, h0, whh_cat, bhh_n):
    """Run the full GRU recurrence in one pallas_call. gi_tbg: (T, B, 3H)."""
    T, B, G = gi_tbg.shape
    H = whh_cat.shape[0]
    tc = _time_chunk(T)
    kernel = functools.partial(gru_seq_kernel, tc=tc, hidden=H)
    return pl.pallas_call(
        kernel,
        out_shape=jax.ShapeDtypeStruct((T, B, H), jnp.float32),
        grid_spec=pltpu.PrefetchScalarGridSpec(
            num_scalar_prefetch=0,
            grid=(T // tc,),
            in_specs=[pl.BlockSpec((tc, B, G), lambda t: (t, 0, 0)),  # chunk of gi
                      pl.BlockSpec((B, H), lambda t: (0, 0)),         # h0 (resident)
                      pl.BlockSpec((H, G), lambda t: (0, 0)),         # Whh (resident)
                      pl.BlockSpec((1, H), lambda t: (0, 0))],        # bhh_n (resident)
            out_specs=pl.BlockSpec((tc, B, H), lambda t: (t, 0, 0)),
            scratch_shapes=[pltpu.VMEM((B, H), jnp.float32)]),
        compiler_params=pltpu.CompilerParams(dimension_semantics=("arbitrary",)),
    )(gi_tbg, h0, whh_cat, bhh_n)


# ----------------------------------------------------------------------------- params
def init_params(key, vocab, embed, hidden):
    ks = jax.random.split(key, 12)
    s = 1.0 / math.sqrt(hidden)
    u = lambda k, shape, sc: jax.random.uniform(k, shape, jnp.float32, -sc, sc)

    def gru_block(kw_ih, kw_hh, kb_ih, kb_hh):
        wih = u(kw_ih, (3, embed, hidden), s)   # gate order [r, z, n] (PyTorch GRU)
        whh = u(kw_hh, (3, hidden, hidden), s)
        bih = u(kb_ih, (3, hidden), s)
        bhh = u(kb_hh, (3, hidden), s)
        wih_cat = jnp.concatenate([wih[0], wih[1], wih[2]], axis=1).astype(jnp.bfloat16)  # (E,3H)
        whh_cat = jnp.concatenate([whh[0], whh[1], whh[2]], axis=1).astype(jnp.bfloat16)  # (H,3H)
        # r/z biases pre-summed (bih+bhh); bih_n folded into gi; bhh_n kept separate.
        bgi = jnp.concatenate([bih[0] + bhh[0], bih[1] + bhh[1], bih[2]])[None, :]        # (1,3H)
        bhn = bhh[2][None, :]                                                             # (1,H)
        return wih_cat, whh_cat, bgi, bhn

    enc_wih, enc_whh, enc_bgi, enc_bhn = gru_block(ks[1], ks[2], ks[3], ks[4])
    dec_wih, dec_whh, dec_bgi, dec_bhn = gru_block(ks[6], ks[7], ks[8], ks[9])

    return dict(
        enc_embed=u(ks[0], (vocab, embed), 0.1),
        enc_wih=enc_wih, enc_whh=enc_whh, enc_bgi=enc_bgi, enc_bhn=enc_bhn,
        dec_embed=u(ks[5], (vocab, embed), 0.1),
        dec_wih=dec_wih, dec_whh=dec_whh, dec_bgi=dec_bgi, dec_bhn=dec_bhn,
        out_w=u(ks[10], (hidden, vocab), s).astype(jnp.bfloat16),
        out_b=u(ks[11], (1, vocab), s),
    )


# ----------------------------------------------------------------------------- model
@functools.partial(jax.jit, static_argnames=("sos_id",))
def seq2seq_forward(params, src_tokens, tgt_tokens, sos_id=1):
    """Forward pass of Seq2seq (teacher-forced decode).

    src_tokens, tgt_tokens : (B, T) int32
    Returns:
      decoder_log_probs : (T, B, V)  log_softmax outputs per decode step
      decoder_hidden    : (B, H)     final decoder hidden state
      encoder_outputs   : (T, B, H)  encoder hidden states (attention context)
    """
    B, T = src_tokens.shape
    H = params["enc_whh"].shape[0]
    V = params["out_w"].shape[1]

    # Pad batch to a multiple of 8 (sublane-dense); pad rows are sliced off at the end.
    B_pad = ((B + 7) // 8) * 8
    pad = B_pad - B
    src_p = jnp.pad(src_tokens, ((0, pad), (0, 0)))

    sos = jnp.full((B, 1), sos_id, jnp.int32)
    dec_in = jnp.concatenate([sos, tgt_tokens[:, :-1]], axis=1)       # (B, T)
    dec_p = jnp.pad(dec_in, ((0, pad), (0, 0)))

    # ---- Encoder: time-major gather, hoisted x@Wih, fused-recurrence GRU ------
    src_emb = jnp.take(params["enc_embed"], src_p.T, axis=0)          # (T, B_pad, E)
    gi_enc = matmul_bias(src_emb.reshape(T * B_pad, -1),
                         params["enc_wih"], params["enc_bgi"]).reshape(T, B_pad, 3 * H)
    h0 = jnp.zeros((B_pad, H), jnp.float32)
    enc_hs = gru_seq(gi_enc, h0, params["enc_whh"], params["enc_bhn"])  # (T, B_pad, H)
    enc_hidden = enc_hs[-1]

    # ---- Decoder: teacher-forced GRU + Linear + log_softmax -------------------
    dec_emb = jnp.take(params["dec_embed"], dec_p.T, axis=0)           # (T, B_pad, E)
    gi_dec = matmul_bias(dec_emb.reshape(T * B_pad, -1),
                         params["dec_wih"], params["dec_bgi"]).reshape(T, B_pad, 3 * H)
    dec_hs = gru_seq(gi_dec, enc_hidden, params["dec_whh"], params["dec_bhn"])
    dec_hidden = dec_hs[-1]

    log_probs = project_log_softmax(dec_hs.reshape(T * B_pad, H),
                                    params["out_w"], params["out_b"])
    log_probs = log_probs.reshape(T, B_pad, V)

    return log_probs[:, :B, :], dec_hidden[:B, :], enc_hs[:, :B, :]


# ----------------------------------------------------------------------------- main
if __name__ == "__main__":
    VOCAB, EMBED, HIDDEN, BATCH, SEQ = 256, 32, 128, 2, 8

    key = jax.random.PRNGKey(0)
    k_params, k_src, k_tgt = jax.random.split(key, 3)

    params = init_params(k_params, VOCAB, EMBED, HIDDEN)
    src_tokens = jax.random.randint(k_src, (BATCH, SEQ), 2, VOCAB, dtype=jnp.int32)
    tgt_tokens = jax.random.randint(k_tgt, (BATCH, SEQ), 2, VOCAB, dtype=jnp.int32)

    dec_log_probs, dec_hidden, enc_outputs = seq2seq_forward(
        params, src_tokens, tgt_tokens, sos_id=1)
    jax.block_until_ready((dec_log_probs, dec_hidden, enc_outputs))

    # sanity: log_softmax rows must sum to ~1 in prob space
    row_sums = jnp.exp(dec_log_probs).sum(axis=-1)
    assert dec_log_probs.shape == (SEQ, BATCH, VOCAB)
    assert dec_hidden.shape == (BATCH, HIDDEN)
    assert enc_outputs.shape == (SEQ, BATCH, HIDDEN)
    assert bool(jnp.allclose(row_sums, 1.0, atol=1e-3))

    print("KERNEL_OK")
</pallas_src>

<mosaic_0001>
module attributes {stable_mosaic.version = 11 : i64} {
  func.func @proj_logsoftmax_kernel(%arg0: i32, %arg1: memref<64x128xf32, #tpu.memory_space<vmem>>, %arg2: memref<128x256xbf16, #tpu.memory_space<vmem>>, %arg3: memref<1x256xf32, #tpu.memory_space<vmem>>, %arg4: memref<64x256xf32, #tpu.memory_space<vmem>>) attributes {dimension_semantics = [#tpu.dimension_semantics<parallel>], iteration_bounds = array<i64: 1>, scalar_prefetch = 0 : i64, scratch_operands = 0 : i64, tpu.core_type = #tpu.core_type<tc>, window_params = [{transform_indices = @transform_0, window_bounds = array<i64: 64, 128>}, {pipeline_mode = #tpu.pipeline_mode<synchronous>, transform_indices = @transform_1, window_bounds = array<i64: 128, 256>}, {pipeline_mode = #tpu.pipeline_mode<synchronous>, transform_indices = @transform_2, window_bounds = array<i64: 1, 256>}, {transform_indices = @transform_3, window_bounds = array<i64: 64, 256>}]} {
    %c0 = arith.constant 0 : index
    %c0_0 = arith.constant 0 : index
    %0 = vector.load %arg1[%c0, %c0_0] : memref<64x128xf32, #tpu.memory_space<vmem>>, vector<64x128xf32>
    %1 = arith.truncf %0 : vector<64x128xf32> to vector<64x128xbf16>
    %c0_1 = arith.constant 0 : index
    %c0_2 = arith.constant 0 : index
    %2 = vector.load %arg2[%c0_1, %c0_2] : memref<128x256xbf16, #tpu.memory_space<vmem>>, vector<128x256xbf16>
    %cst = arith.constant dense<0.000000e+00> : vector<64x256xf32>
    %3 = tpu.matmul %1, %2, %cst {dimension_numbers = #tpu.dot_dimension_numbers<[1], [0], [0], [1], [0, 0, 1, 1], [], []>} : vector<64x128xbf16>, vector<128x256xbf16>, vector<64x256xf32> -> vector<64x256xf32>
    %c0_3 = arith.constant 0 : index
    %c0_4 = arith.constant 0 : index
    %4 = vector.load %arg3[%c0_3, %c0_4] : memref<1x256xf32, #tpu.memory_space<vmem>>, vector<1x256xf32>
    %5 = vector.broadcast %4 : vector<1x256xf32> to vector<64x256xf32>
    %6 = arith.addf %3, %5 : vector<64x256xf32>
    %cst_5 = arith.constant dense<0xFF800000> : vector<64xf32>
    %7 = vector.multi_reduction <maximumf>, %6, %cst_5 [1] : vector<64x256xf32> to vector<64xf32>
    %8 = vector.shape_cast %7 : vector<64xf32> to vector<64x1xf32>
    %9 = vector.broadcast %8 : vector<64x1xf32> to vector<64x256xf32>
    %10 = arith.subf %6, %9 : vector<64x256xf32>
    %11 = math.exp %10 : vector<64x256xf32>
    %cst_6 = arith.constant dense<0.000000e+00> : vector<64xf32>
    %12 = vector.multi_reduction <add>, %11, %cst_6 [1] : vector<64x256xf32> to vector<64xf32>
    %13 = vector.shape_cast %12 : vector<64xf32> to vector<64x1xf32>
    %14 = math.log %13 : vector<64x1xf32>
    %15 = vector.broadcast %14 : vector<64x1xf32> to vector<64x256xf32>
    %16 = arith.subf %10, %15 : vector<64x256xf32>
    %c0_7 = arith.constant 0 : index
    %c0_8 = arith.constant 0 : index
    %17 = vector.load %arg4[%c0_7, %c0_8] : memref<64x256xf32, #tpu.memory_space<vmem>>, vector<64x256xf32>
    tpu.vector_store %arg4[%c0_7, %c0_8], %16 {strides = array<i32>} : memref<64x256xf32, #tpu.memory_space<vmem>>, vector<64x256xf32>,
    return
  }
  func.func @transform_0(%arg0: i32) -> (i32, i32) {
    %c0_i32 = arith.constant 0 : i32
    %c0_i32_0 = arith.constant 0 : i32
    return %arg0, %c0_i32 : i32, i32
  }
  func.func @transform_1(%arg0: i32) -> (i32, i32) {
    %c0_i32 = arith.constant 0 : i32
    %c0_i32_0 = arith.constant 0 : i32
    %c0_i32_1 = arith.constant 0 : i32
    return %c0_i32, %c0_i32_0 : i32, i32
  }
  func.func @transform_2(%arg0: i32) -> (i32, i32) {
    %c0_i32 = arith.constant 0 : i32
    %c0_i32_0 = arith.constant 0 : i32
    %c0_i32_1 = arith.constant 0 : i32
    return %c0_i32, %c0_i32_0 : i32, i32
  }
  func.func @transform_3(%arg0: i32) -> (i32, i32) {
    %c0_i32 = arith.constant 0 : i32
    %c0_i32_0 = arith.constant 0 : i32
    return %arg0, %c0_i32 : i32, i32
  }
}

module attributes {stable_mosaic.version = 11 : i64} {
  func.func @matmul_bias_kernel(%arg0: i32, %arg1: memref<64x32xf32, #tpu.memory_space<vmem>>, %arg2: memref<32x384xbf16, #tpu.memory_space<vmem>>, %arg3: memref<1x384xf32, #tpu.memory_space<vmem>>, %arg4: memref<64x384xf32, #tpu.memory_space<vmem>>) attributes {dimension_semantics = [#tpu.dimension_semantics<parallel>], iteration_bounds = array<i64: 1>, scalar_prefetch = 0 : i64, scratch_operands = 0 : i64, tpu.core_type = #tpu.core_type<tc>, window_params = [{transform_indices = @transform_0, window_bounds = array<i64: 64, 32>}, {pipeline_mode = #tpu.pipeline_mode<synchronous>, transform_indices = @transform_1, window_bounds = array<i64: 32, 384>}, {pipeline_mode = #tpu.pipeline_mode<synchronous>, transform_indices = @transform_2, window_bounds = array<i64: 1, 384>}, {transform_indices = @transform_3, window_bounds = array<i64: 64, 384>}]} {
    %c0 = arith.constant 0 : index
    %c0_0 = arith.constant 0 : index
    %0 = vector.load %arg1[%c0, %c0_0] : memref<64x32xf32, #tpu.memory_space<vmem>>, vector<64x32xf32>
    %1 = arith.truncf %0 : vector<64x32xf32> to vector<64x32xbf16>
    %c0_1 = arith.constant 0 : index
    %c0_2 = arith.constant 0 : index
    %2 = vector.load %arg2[%c0_1, %c0_2] : memref<32x384xbf16, #tpu.memory_space<vmem>>, vector<32x384xbf16>
    %cst = arith.constant dense<0.000000e+00> : vector<64x384xf32>
    %3 = tpu.matmul %1, %2, %cst {dimension_numbers = #tpu.dot_dimension_numbers<[1], [0], [0], [1], [0, 0, 1, 1], [], []>} : vector<64x32xbf16>, vector<32x384xbf16>, vector<64x384xf32> -> vector<64x384xf32>
    %c0_3 = arith.constant 0 : index
    %c0_4 = arith.constant 0 : index
    %4 = vector.load %arg3[%c0_3, %c0_4] : memref<1x384xf32, #tpu.memory_space<vmem>>, vector<1x384xf32>
    %5 = vector.broadcast %4 : vector<1x384xf32> to vector<64x384xf32>
    %6 = arith.addf %3, %5 : vector<64x384xf32>
    %c0_5 = arith.constant 0 : index
    %c0_6 = arith.constant 0 : index
    %7 = vector.load %arg4[%c0_5, %c0_6] : memref<64x384xf32, #tpu.memory_space<vmem>>, vector<64x384xf32>
    tpu.vector_store %arg4[%c0_5, %c0_6], %6 {strides = array<i32>} : memref<64x384xf32, #tpu.memory_space<vmem>>, vector<64x384xf32>,
    return
  }
  func.func @transform_0(%arg0: i32) -> (i32, i32) {
    %c0_i32 = arith.constant 0 : i32
    %c0_i32_0 = arith.constant 0 : i32
    return %arg0, %c0_i32 : i32, i32
  }
  func.func @transform_1(%arg0: i32) -> (i32, i32) {
    %c0_i32 = arith.constant 0 : i32
    %c0_i32_0 = arith.constant 0 : i32
    %c0_i32_1 = arith.constant 0 : i32
    return %c0_i32, %c0_i32_0 : i32, i32
  }
  func.func @transform_2(%arg0: i32) -> (i32, i32) {
    %c0_i32 = arith.constant 0 : i32
    %c0_i32_0 = arith.constant 0 : i32
    %c0_i32_1 = arith.constant 0 : i32
    return %c0_i32, %c0_i32_0 : i32, i32
  }
  func.func @transform_3(%arg0: i32) -> (i32, i32) {
    %c0_i32 = arith.constant 0 : i32
    %c0_i32_0 = arith.constant 0 : i32
    return %arg0, %c0_i32 : i32, i32
  }
}

module attributes {stable_mosaic.version = 11 : i64} {
  func.func @gru_seq_kernel(%arg0: i32, %arg1: memref<8x8x384xf32, #tpu.memory_space<vmem>>, %arg2: memref<8x128xf32, #tpu.memory_space<vmem>>, %arg3: memref<128x384xbf16, #tpu.memory_space<vmem>>, %arg4: memref<1x128xf32, #tpu.memory_space<vmem>>, %arg5: memref<8x8x128xf32, #tpu.memory_space<vmem>>, %arg6: memref<8x128xf32, #tpu.memory_space<vmem>>) attributes {dimension_semantics = [#tpu.dimension_semantics<arbitrary>], iteration_bounds = array<i64: 1>, scalar_prefetch = 0 : i64, scratch_operands = 1 : i64, tpu.core_type = #tpu.core_type<tc>, window_params = [{transform_indices = @transform_0, window_bounds = array<i64: 8, 8, 384>}, {pipeline_mode = #tpu.pipeline_mode<synchronous>, transform_indices = @transform_1, window_bounds = array<i64: 8, 128>}, {pipeline_mode = #tpu.pipeline_mode<synchronous>, transform_indices = @transform_2, window_bounds = array<i64: 128, 384>}, {pipeline_mode = #tpu.pipeline_mode<synchronous>, transform_indices = @transform_3, window_bounds = array<i64: 1, 128>}, {transform_indices = @transform_4, window_bounds = array<i64: 8, 8, 128>}]} {
    %c0_i32 = arith.constant 0 : i32
    %0 = arith.cmpi eq, %arg0, %c0_i32 : i32
    %1 = arith.extui %0 : i1 to i32
    %c0_i32_0 = arith.constant 0 : i32
    %2 = arith.cmpi ne, %1, %c0_i32_0 : i32
    scf.if %2 {
      %c0_100 = arith.constant 0 : index
      %c0_101 = arith.constant 0 : index
      %285 = vector.load %arg2[%c0_100, %c0_101] : memref<8x128xf32, #tpu.memory_space<vmem>>, vector<8x128xf32>
      %c0_102 = arith.constant 0 : index
      %c0_103 = arith.constant 0 : index
      %286 = vector.load %arg6[%c0_102, %c0_103] : memref<8x128xf32, #tpu.memory_space<vmem>>, vector<8x128xf32>
      tpu.vector_store %arg6[%c0_102, %c0_103], %285 {strides = array<i32>} : memref<8x128xf32, #tpu.memory_space<vmem>>, vector<8x128xf32>,
    } else {
    }
    %c0 = arith.constant 0 : index
    %c0_1 = arith.constant 0 : index
    %3 = vector.load %arg6[%c0, %c0_1] : memref<8x128xf32, #tpu.memory_space<vmem>>, vector<8x128xf32>
    %4 = arith.truncf %3 : vector<8x128xf32> to vector<8x128xbf16>
    %c0_2 = arith.constant 0 : index
    %c0_3 = arith.constant 0 : index
    %5 = vector.load %arg3[%c0_2, %c0_3] : memref<128x384xbf16, #tpu.memory_space<vmem>>, vector<128x384xbf16>
    %cst = arith.constant dense<0.000000e+00> : vector<8x384xf32>
    %6 = tpu.matmul %4, %5, %cst {dimension_numbers = #tpu.dot_dimension_numbers<[1], [0], [0], [1], [0, 0, 1, 1], [], []>} : vector<8x128xbf16>, vector<128x384xbf16>, vector<8x384xf32> -> vector<8x384xf32>
    %c0_4 = arith.constant 0 : index
    %c0_5 = arith.constant 0 : index
    %c0_6 = arith.constant 0 : index
    %7 = vector.load %arg1[%c0_4, %c0_5, %c0_6] : memref<8x8x384xf32, #tpu.memory_space<vmem>>, vector<1x8x384xf32>
    %8 = vector.shape_cast %7 : vector<1x8x384xf32> to vector<8x384xf32>
    %9 = vector.extract_strided_slice %8 {offsets = [0, 0], sizes = [8, 128], strides = [1, 1]} : vector<8x384xf32> to vector<8x128xf32>
    %10 = vector.extract_strided_slice %6 {offsets = [0, 0], sizes = [8, 128], strides = [1, 1]} : vector<8x384xf32> to vector<8x128xf32>
    %11 = arith.addf %9, %10 : vector<8x128xf32>
    %12 = arith.negf %11 : vector<8x128xf32>
    %13 = math.exp %12 : vector<8x128xf32>
    %cst_7 = arith.constant 1.000000e+00 : f32
    %14 = vector.broadcast %cst_7 : f32 to vector<8x128xf32>
    %15 = arith.addf %14, %13 : vector<8x128xf32>
    %16 = arith.divf %14, %15 : vector<8x128xf32>
    %17 = vector.extract_strided_slice %8 {offsets = [0, 128], sizes = [8, 128], strides = [1, 1]} : vector<8x384xf32> to vector<8x128xf32>
    %18 = vector.extract_strided_slice %6 {offsets = [0, 128], sizes = [8, 128], strides = [1, 1]} : vector<8x384xf32> to vector<8x128xf32>
    %19 = arith.addf %17, %18 : vector<8x128xf32>
    %20 = arith.negf %19 : vector<8x128xf32>
    %21 = math.exp %20 : vector<8x128xf32>
    %cst_8 = arith.constant 1.000000e+00 : f32
    %22 = vector.broadcast %cst_8 : f32 to vector<8x128xf32>
    %23 = arith.addf %22, %21 : vector<8x128xf32>
    %24 = arith.divf %22, %23 : vector<8x128xf32>
    %25 = vector.extract_strided_slice %8 {offsets = [0, 256], sizes = [8, 128], strides = [1, 1]} : vector<8x384xf32> to vector<8x128xf32>
    %26 = vector.extract_strided_slice %6 {offsets = [0, 256], sizes = [8, 128], strides = [1, 1]} : vector<8x384xf32> to vector<8x128xf32>
    %c0_9 = arith.constant 0 : index
    %c0_10 = arith.constant 0 : index
    %27 = vector.load %arg4[%c0_9, %c0_10] : memref<1x128xf32, #tpu.memory_space<vmem>>, vector<1x128xf32>
    %28 = vector.broadcast %27 : vector<1x128xf32> to vector<8x128xf32>
    %29 = arith.addf %26, %28 : vector<8x128xf32>
    %30 = arith.mulf %16, %29 : vector<8x128xf32>
    %31 = arith.addf %25, %30 : vector<8x128xf32>
    %32 = math.tanh %31 : vector<8x128xf32>
    %33 = arith.subf %3, %32 : vector<8x128xf32>
    %34 = arith.mulf %24, %33 : vector<8x128xf32>
    %35 = arith.addf %32, %34 : vector<8x128xf32>
    %c0_11 = arith.constant 0 : index
    %c0_12 = arith.constant 0 : index
    %c0_13 = arith.constant 0 : index
    %36 = vector.load %arg5[%c0_11, %c0_12, %c0_13] : memref<8x8x128xf32, #tpu.memory_space<vmem>>, vector<1x8x128xf32>
    %37 = vector.shape_cast %36 : vector<1x8x128xf32> to vector<8x128xf32>
    %38 = vector.shape_cast %35 : vector<8x128xf32> to vector<1x8x128xf32>
    tpu.vector_store %arg5[%c0_11, %c0_12, %c0_13], %38 {strides = array<i32>} : memref<8x8x128xf32, #tpu.memory_space<vmem>>, vector<1x8x128xf32>,
    %39 = arith.truncf %35 : vector<8x128xf32> to vector<8x128xbf16>
    %c0_14 = arith.constant 0 : index
    %c0_15 = arith.constant 0 : index
    %40 = vector.load %arg3[%c0_14, %c0_15] : memref<128x384xbf16, #tpu.memory_space<vmem>>, vector<128x384xbf16>
    %cst_16 = arith.constant dense<0.000000e+00> : vector<8x384xf32>
    %41 = tpu.matmul %39, %40, %cst_16 {dimension_numbers = #tpu.dot_dimension_numbers<[1], [0], [0], [1], [0, 0, 1, 1], [], []>} : vector<8x128xbf16>, vector<128x384xbf16>, vector<8x384xf32> -> vector<8x384xf32>
    %c1 = arith.constant 1 : index
    %c0_17 = arith.constant 0 : index
    %c0_18 = arith.constant 0 : index
    %42 = vector.load %arg1[%c1, %c0_17, %c0_18] : memref<8x8x384xf32, #tpu.memory_space<vmem>>, vector<1x8x384xf32>
    %43 = vector.shape_cast %42 : vector<1x8x384xf32> to vector<8x384xf32>
    %44 = vector.extract_strided_slice %43 {offsets = [0, 0], sizes = [8, 128], strides = [1, 1]} : vector<8x384xf32> to vector<8x128xf32>
    %45 = vector.extract_strided_slice %41 {offsets = [0, 0], sizes = [8, 128], strides = [1, 1]} : vector<8x384xf32> to vector<8x128xf32>
    %46 = arith.addf %44, %45 : vector<8x128xf32>
    %47 = arith.negf %46 : vector<8x128xf32>
    %48 = math.exp %47 : vector<8x128xf32>
    %cst_19 = arith.constant 1.000000e+00 : f32
    %49 = vector.broadcast %cst_19 : f32 to vector<8x128xf32>
    %50 = arith.addf %49, %48 : vector<8x128xf32>
    %51 = arith.divf %49, %50 : vector<8x128xf32>
    %52 = vector.extract_strided_slice %43 {offsets = [0, 128], sizes = [8, 128], strides = [1, 1]} : vector<8x384xf32> to vector<8x128xf32>
    %53 = vector.extract_strided_slice %41 {offsets = [0, 128], sizes = [8, 128], strides = [1, 1]} : vector<8x384xf32> to vector<8x128xf32>
    %54 = arith.addf %52, %53 : vector<8x128xf32>
    %55 = arith.negf %54 : vector<8x128xf32>
    %56 = math.exp %55 : vector<8x128xf32>
    %cst_20 = arith.constant 1.000000e+00 : f32
    %57 = vector.broadcast %cst_20 : f32 to vector<8x128xf32>
    %58 = arith.addf %57, %56 : vector<8x128xf32>
    %59 = arith.divf %57, %58 : vector<8x128xf32>
    %60 = vector.extract_strided_slice %43 {offsets = [0, 256], sizes = [8, 128], strides = [1, 1]} : vector<8x384xf32> to vector<8x128xf32>
    %61 = vector.extract_strided_slice %41 {offsets = [0, 256], sizes = [8, 128], strides = [1, 1]} : vector<8x384xf32> to vector<8x128xf32>
    %c0_21 = arith.constant 0 : index
    %c0_22 = arith.constant 0 : index
    %62 = vector.load %arg4[%c0_21, %c0_22] : memref<1x128xf32, #tpu.memory_space<vmem>>, vector<1x128xf32>
    %63 = vector.broadcast %62 : vector<1x128xf32> to vector<8x128xf32>
    %64 = arith.addf %61, %63 : vector<8x128xf32>
    %65 = arith.mulf %51, %64 : vector<8x128xf32>
    %66 = arith.addf %60, %65 : vector<8x128xf32>
    %67 = math.tanh %66 : vector<8x128xf32>
    %68 = arith.subf %35, %67 : vector<8x128xf32>
    %69 = arith.mulf %59, %68 : vector<8x128xf32>
    %70 = arith.addf %67, %69 : vector<8x128xf32>
    %c1_23 = arith.constant 1 : index
    %c0_24 = arith.constant 0 : index
    %c0_25 = arith.constant 0 : index
    %71 = vector.load %arg5[%c1_23, %c0_24, %c0_25] : memref<8x8x128xf32, #tpu.memory_space<vmem>>, vector<1x8x128xf32>
    %72 = vector.shape_cast %71 : vector<1x8x128xf32> to vector<8x128xf32>
    %73 = vector.shape_cast %70 : vector<8x128xf32> to vector<1x8x128xf32>
    tpu.vector_store %arg5[%c1_23, %c0_24, %c0_25], %73 {strides = array<i32>} : memref<8x8x128xf32, #tpu.memory_space<vmem>>, vector<1x8x128xf32>,
    %74 = arith.truncf %70 : vector<8x128xf32> to vector<8x128xbf16>
    %c0_26 = arith.constant 0 : index
    %c0_27 = arith.constant 0 : index
    %75 = vector.load %arg3[%c0_26, %c0_27] : memref<128x384xbf16, #tpu.memory_space<vmem>>, vector<128x384xbf16>
    %cst_28 = arith.constant dense<0.000000e+00> : vector<8x384xf32>
    %76 = tpu.matmul %74, %75, %cst_28 {dimension_numbers = #tpu.dot_dimension_numbers<[1], [0], [0], [1], [0, 0, 1, 1], [], []>} : vector<8x128xbf16>, vector<128x384xbf16>, vector<8x384xf32> -> vector<8x384xf32>
    %c2 = arith.constant 2 : index
    %c0_29 = arith.constant 0 : index
    %c0_30 = arith.constant 0 : index
    %77 = vector.load %arg1[%c2, %c0_29, %c0_30] : memref<8x8x384xf32, #tpu.memory_space<vmem>>, vector<1x8x384xf32>
    %78 = vector.shape_cast %77 : vector<1x8x384xf32> to vector<8x384xf32>
    %79 = vector.extract_strided_slice %78 {offsets = [0, 0], sizes = [8, 128], strides = [1, 1]} : vector<8x384xf32> to vector<8x128xf32>
    %80 = vector.extract_strided_slice %76 {offsets = [0, 0], sizes = [8, 128], strides = [1, 1]} : vector<8x384xf32> to vector<8x128xf32>
    %81 = arith.addf %79, %80 : vector<8x128xf32>
    %82 = arith.negf %81 : vector<8x128xf32>
    %83 = math.exp %82 : vector<8x128xf32>
    %cst_31 = arith.constant 1.000000e+00 : f32
    %84 = vector.broadcast %cst_31 : f32 to vector<8x128xf32>
    %85 = arith.addf %84, %83 : vector<8x128xf32>
    %86 = arith.divf %84, %85 : vector<8x128xf32>
    %87 = vector.extract_strided_slice %78 {offsets = [0, 128], sizes = [8, 128], strides = [1, 1]} : vector<8x384xf32> to vector<8x128xf32>
    %88 = vector.extract_strided_slice %76 {offsets = [0, 128], sizes = [8, 128], strides = [1, 1]} : vector<8x384xf32> to vector<8x128xf32>
    %89 = arith.addf %87, %88 : vector<8x128xf32>
    %90 = arith.negf %89 : vector<8x128xf32>
    %91 = math.exp %90 : vector<8x128xf32>
    %cst_32 = arith.constant 1.000000e+00 : f32
    %92 = vector.broadcast %cst_32 : f32 to vector<8x128xf32>
    %93 = arith.addf %92, %91 : vector<8x128xf32>
    %94 = arith.divf %92, %93 : vector<8x128xf32>
    %95 = vector.extract_strided_slice %78 {offsets = [0, 256], sizes = [8, 128], strides = [1, 1]} : vector<8x384xf32> to vector<8x128xf32>
    %96 = vector.extract_strided_slice %76 {offsets = [0, 256], sizes = [8, 128], strides = [1, 1]} : vector<8x384xf32> to vector<8x128xf32>
    %c0_33 = arith.constant 0 : index
    %c0_34 = arith.constant 0 : index
    %97 = vector.load %arg4[%c0_33, %c0_34] : memref<1x128xf32, #tpu.memory_space<vmem>>, vector<1x128xf32>
    %98 = vector.broadcast %97 : vector<1x128xf32> to vector<8x128xf32>
    %99 = arith.addf %96, %98 : vector<8x128xf32>
    %100 = arith.mulf %86, %99 : vector<8x128xf32>
    %101 = arith.addf %95, %100 : vector<8x128xf32>
    %102 = math.tanh %101 : vector<8x128xf32>
    %103 = arith.subf %70, %102 : vector<8x128xf32>
    %104 = arith.mulf %94, %103 : vector<8x128xf32>
    %105 = arith.addf %102, %104 : vector<8x128xf32>
    %c2_35 = arith.constant 2 : index
    %c0_36 = arith.constant 0 : index
    %c0_37 = arith.constant 0 : index
    %106 = vector.load %arg5[%c2_35, %c0_36, %c0_37] : memref<8x8x128xf32, #tpu.memory_space<vmem>>, vector<1x8x128xf32>
    %107 = vector.shape_cast %106 : vector<1x8x128xf32> to vector<8x128xf32>
    %108 = vector.shape_cast %105 : vector<8x128xf32> to vector<1x8x128xf32>
    tpu.vector_store %arg5[%c2_35, %c0_36, %c0_37], %108 {strides = array<i32>} : memref<8x8x128xf32, #tpu.memory_space<vmem>>, vector<1x8x128xf32>,
    %109 = arith.truncf %105 : vector<8x128xf32> to vector<8x128xbf16>
    %c0_38 = arith.constant 0 : index
    %c0_39 = arith.constant 0 : index
    %110 = vector.load %arg3[%c0_38, %c0_39] : memref<128x384xbf16, #tpu.memory_space<vmem>>, vector<128x384xbf16>
    %cst_40 = arith.constant dense<0.000000e+00> : vector<8x384xf32>
    %111 = tpu.matmul %109, %110, %cst_40 {dimension_numbers = #tpu.dot_dimension_numbers<[1], [0], [0], [1], [0, 0, 1, 1], [], []>} : vector<8x128xbf16>, vector<128x384xbf16>, vector<8x384xf32> -> vector<8x384xf32>
    %c3 = arith.constant 3 : index
    %c0_41 = arith.constant 0 : index
    %c0_42 = arith.constant 0 : index
    %112 = vector.load %arg1[%c3, %c0_41, %c0_42] : memref<8x8x384xf32, #tpu.memory_space<vmem>>, vector<1x8x384xf32>
    %113 = vector.shape_cast %112 : vector<1x8x384xf32> to vector<8x384xf32>
    %114 = vector.extract_strided_slice %113 {offsets = [0, 0], sizes = [8, 128], strides = [1, 1]} : vector<8x384xf32> to vector<8x128xf32>
    %115 = vector.extract_strided_slice %111 {offsets = [0, 0], sizes = [8, 128], strides = [1, 1]} : vector<8x384xf32> to vector<8x128xf32>
    %116 = arith.addf %114, %115 : vector<8x128xf32>
    %117 = arith.negf %116 : vector<8x128xf32>
    %118 = math.exp %117 : vector<8x128xf32>
    %cst_43 = arith.constant 1.000000e+00 : f32
    %119 = vector.broadcast %cst_43 : f32 to vector<8x128xf32>
    %120 = arith.addf %119, %118 : vector<8x128xf32>
    %121 = arith.divf %119, %120 : vector<8x128xf32>
    %122 = vector.extract_strided_slice %113 {offsets = [0, 128], sizes = [8, 128], strides = [1, 1]} : vector<8x384xf32> to vector<8x128xf32>
    %123 = vector.extract_strided_slice %111 {offsets = [0, 128], sizes = [8, 128], strides = [1, 1]} : vector<8x384xf32> to vector<8x128xf32>
    %124 = arith.addf %122, %123 : vector<8x128xf32>
    %125 = arith.negf %124 : vector<8x128xf32>
    %126 = math.exp %125 : vector<8x128xf32>
    %cst_44 = arith.constant 1.000000e+00 : f32
    %127 = vector.broadcast %cst_44 : f32 to vector<8x128xf32>
    %128 = arith.addf %127, %126 : vector<8x128xf32>
    %129 = arith.divf %127, %128 : vector<8x128xf32>
    %130 = vector.extract_strided_slice %113 {offsets = [0, 256], sizes = [8, 128], strides = [1, 1]} : vector<8x384xf32> to vector<8x128xf32>
    %131 = vector.extract_strided_slice %111 {offsets = [0, 256], sizes = [8, 128], strides = [1, 1]} : vector<8x384xf32> to vector<8x128xf32>
    %c0_45 = arith.constant 0 : index
    %c0_46 = arith.constant 0 : index
    %132 = vector.load %arg4[%c0_45, %c0_46] : memref<1x128xf32, #tpu.memory_space<vmem>>, vector<1x128xf32>
    %133 = vector.broadcast %132 : vector<1x128xf32> to vector<8x128xf32>
    %134 = arith.addf %131, %133 : vector<8x128xf32>
    %135 = arith.mulf %121, %134 : vector<8x128xf32>
    %136 = arith.addf %130, %135 : vector<8x128xf32>
    %137 = math.tanh %136 : vector<8x128xf32>
    %138 = arith.subf %105, %137 : vector<8x128xf32>
    %139 = arith.mulf %129, %138 : vector<8x128xf32>
    %140 = arith.addf %137, %139 : vector<8x128xf32>
    %c3_47 = arith.constant 3 : index
    %c0_48 = arith.constant 0 : index
    %c0_49 = arith.constant 0 : index
    %141 = vector.load %arg5[%c3_47, %c0_48, %c0_49] : memref<8x8x128xf32, #tpu.memory_space<vmem>>, vector<1x8x128xf32>
    %142 = vector.shape_cast %141 : vector<1x8x128xf32> to vector<8x128xf32>
    %143 = vector.shape_cast %140 : vector<8x128xf32> to vector<1x8x128xf32>
    tpu.vector_store %arg5[%c3_47, %c0_48, %c0_49], %143 {strides = array<i32>} : memref<8x8x128xf32, #tpu.memory_space<vmem>>, vector<1x8x128xf32>,
    %144 = arith.truncf %140 : vector<8x128xf32> to vector<8x128xbf16>
    %c0_50 = arith.constant 0 : index
    %c0_51 = arith.constant 0 : index
    %145 = vector.load %arg3[%c0_50, %c0_51] : memref<128x384xbf16, #tpu.memory_space<vmem>>, vector<128x384xbf16>
    %cst_52 = arith.constant dense<0.000000e+00> : vector<8x384xf32>
    %146 = tpu.matmul %144, %145, %cst_52 {dimension_numbers = #tpu.dot_dimension_numbers<[1], [0], [0], [1], [0, 0, 1, 1], [], []>} : vector<8x128xbf16>, vector<128x384xbf16>, vector<8x384xf32> -> vector<8x384xf32>
    %c4 = arith.constant 4 : index
    %c0_53 = arith.constant 0 : index
    %c0_54 = arith.constant 0 : index
    %147 = vector.load %arg1[%c4, %c0_53, %c0_54] : memref<8x8x384xf32, #tpu.memory_space<vmem>>, vector<1x8x384xf32>
    %148 = vector.shape_cast %147 : vector<1x8x384xf32> to vector<8x384xf32>
    %149 = vector.extract_strided_slice %148 {offsets = [0, 0], sizes = [8, 128], strides = [1, 1]} : vector<8x384xf32> to vector<8x128xf32>
    %150 = vector.extract_strided_slice %146 {offsets = [0, 0], sizes = [8, 128], strides = [1, 1]} : vector<8x384xf32> to vector<8x128xf32>
    %151 = arith.addf %149, %150 : vector<8x128xf32>
    %152 = arith.negf %151 : vector<8x128xf32>
    %153 = math.exp %152 : vector<8x128xf32>
    %cst_55 = arith.constant 1.000000e+00 : f32
    %154 = vector.broadcast %cst_55 : f32 to vector<8x128xf32>
    %155 = arith.addf %154, %153 : vector<8x128xf32>
    %156 = arith.divf %154, %155 : vector<8x128xf32>
    %157 = vector.extract_strided_slice %148 {offsets = [0, 128], sizes = [8, 128], strides = [1, 1]} : vector<8x384xf32> to vector<8x128xf32>
    %158 = vector.extract_strided_slice %146 {offsets = [0, 128], sizes = [8, 128], strides = [1, 1]} : vector<8x384xf32> to vector<8x128xf32>
    %159 = arith.addf %157, %158 : vector<8x128xf32>
    %160 = arith.negf %159 : vector<8x128xf32>
    %161 = math.exp %160 : vector<8x128xf32>
    %cst_56 = arith.constant 1.000000e+00 : f32
    %162 = vector.broadcast %cst_56 : f32 to vector<8x128xf32>
    %163 = arith.addf %162, %161 : vector<8x128xf32>
    %164 = arith.divf %162, %163 : vector<8x128xf32>
    %165 = vector.extract_strided_slice %148 {offsets = [0, 256], sizes = [8, 128], strides = [1, 1]} : vector<8x384xf32> to vector<8x128xf32>
    %166 = vector.extract_strided_slice %146 {offsets = [0, 256], sizes = [8, 128], strides = [1, 1]} : vector<8x384xf32> to vector<8x128xf32>
    %c0_57 = arith.constant 0 : index
    %c0_58 = arith.constant 0 : index
    %167 = vector.load %arg4[%c0_57, %c0_58] : memref<1x128xf32, #tpu.memory_space<vmem>>, vector<1x128xf32>
    %168 = vector.broadcast %167 : vector<1x128xf32> to vector<8x128xf32>
    %169 = arith.addf %166, %168 : vector<8x128xf32>
    %170 = arith.mulf %156, %169 : vector<8x128xf32>
    %171 = arith.addf %165, %170 : vector<8x128xf32>
    %172 = math.tanh %171 : vector<8x128xf32>
    %173 = arith.subf %140, %172 : vector<8x128xf32>
    %174 = arith.mulf %164, %173 : vector<8x128xf32>
    %175 = arith.addf %172, %174 : vector<8x128xf32>
    %c4_59 = arith.constant 4 : index
    %c0_60 = arith.constant 0 : index
    %c0_61 = arith.constant 0 : index
    %176 = vector.load %arg5[%c4_59, %c0_60, %c0_61] : memref<8x8x128xf32, #tpu.memory_space<vmem>>, vector<1x8x128xf32>
    %177 = vector.shape_cast %176 : vector<1x8x128xf32> to vector<8x128xf32>
    %178 = vector.shape_cast %175 : vector<8x128xf32> to vector<1x8x128xf32>
    tpu.vector_store %arg5[%c4_59, %c0_60, %c0_61], %178 {strides = array<i32>} : memref<8x8x128xf32, #tpu.memory_space<vmem>>, vector<1x8x128xf32>,
    %179 = arith.truncf %175 : vector<8x128xf32> to vector<8x128xbf16>
    %c0_62 = arith.constant 0 : index
    %c0_63 = arith.constant 0 : index
    %180 = vector.load %arg3[%c0_62, %c0_63] : memref<128x384xbf16, #tpu.memory_space<vmem>>, vector<128x384xbf16>
    %cst_64 = arith.constant dense<0.000000e+00> : vector<8x384xf32>
    %181 = tpu.matmul %179, %180, %cst_64 {dimension_numbers = #tpu.dot_dimension_numbers<[1], [0], [0], [1], [0, 0, 1, 1], [], []>} : vector<8x128xbf16>, vector<128x384xbf16>, vector<8x384xf32> -> vector<8x384xf32>
    %c5 = arith.constant 5 : index
    %c0_65 = arith.constant 0 : index
    %c0_66 = arith.constant 0 : index
    %182 = vector.load %arg1[%c5, %c0_65, %c0_66] : memref<8x8x384xf32, #tpu.memory_space<vmem>>, vector<1x8x384xf32>
    %183 = vector.shape_cast %182 : vector<1x8x384xf32> to vector<8x384xf32>
    %184 = vector.extract_strided_slice %183 {offsets = [0, 0], sizes = [8, 128], strides = [1, 1]} : vector<8x384xf32> to vector<8x128xf32>
    %185 = vector.extract_strided_slice %181 {offsets = [0, 0], sizes = [8, 128], strides = [1, 1]} : vector<8x384xf32> to vector<8x128xf32>
    %186 = arith.addf %184, %185 : vector<8x128xf32>
    %187 = arith.negf %186 : vector<8x128xf32>
    %188 = math.exp %187 : vector<8x128xf32>
    %cst_67 = arith.constant 1.000000e+00 : f32
    %189 = vector.broadcast %cst_67 : f32 to vector<8x128xf32>
    %190 = arith.addf %189, %188 : vector<8x128xf32>
    %191 = arith.divf %189, %190 : vector<8x128xf32>
    %192 = vector.extract_strided_slice %183 {offsets = [0, 128], sizes = [8, 128], strides = [1, 1]} : vector<8x384xf32> to vector<8x128xf32>
    %193 = vector.extract_strided_slice %181 {offsets = [0, 128], sizes = [8, 128], strides = [1, 1]} : vector<8x384xf32> to vector<8x128xf32>
    %194 = arith.addf %192, %193 : vector<8x128xf32>
    %195 = arith.negf %194 : vector<8x128xf32>
    %196 = math.exp %195 : vector<8x128xf32>
    %cst_68 = arith.constant 1.000000e+00 : f32
    %197 = vector.broadcast %cst_68 : f32 to vector<8x128xf32>
    %198 = arith.addf %197, %196 : vector<8x128xf32>
    %199 = arith.divf %197, %198 : vector<8x128xf32>
    %200 = vector.extract_strided_slice %183 {offsets = [0, 256], sizes = [8, 128], strides = [1, 1]} : vector<8x384xf32> to vector<8x128xf32>
    %201 = vector.extract_strided_slice %181 {offsets = [0, 256], sizes = [8, 128], strides = [1, 1]} : vector<8x384xf32> to vector<8x128xf32>
    %c0_69 = arith.constant 0 : index
    %c0_70 = arith.constant 0 : index
    %202 = vector.load %arg4[%c0_69, %c0_70] : memref<1x128xf32, #tpu.memory_space<vmem>>, vector<1x128xf32>
    %203 = vector.broadcast %202 : vector<1x128xf32> to vector<8x128xf32>
    %204 = arith.addf %201, %203 : vector<8x128xf32>
    %205 = arith.mulf %191, %204 : vector<8x128xf32>
    %206 = arith.addf %200, %205 : vector<8x128xf32>
    %207 = math.tanh %206 : vector<8x128xf32>
    %208 = arith.subf %175, %207 : vector<8x128xf32>
    %209 = arith.mulf %199, %208 : vector<8x128xf32>
    %210 = arith.addf %207, %209 : vector<8x128xf32>
    %c5_71 = arith.constant 5 : index
    %c0_72 = arith.constant 0 : index
    %c0_73 = arith.constant 0 : index
    %211 = vector.load %arg5[%c5_71, %c0_72, %c0_73] : memref<8x8x128xf32, #tpu.memory_space<vmem>>, vector<1x8x128xf32>
    %212 = vector.shape_cast %211 : vector<1x8x128xf32> to vector<8x128xf32>
    %213 = vector.shape_cast %210 : vector<8x128xf32> to vector<1x8x128xf32>
    tpu.vector_store %arg5[%c5_71, %c0_72, %c0_73], %213 {strides = array<i32>} : memref<8x8x128xf32, #tpu.memory_space<vmem>>, vector<1x8x128xf32>,
    %214 = arith.truncf %210 : vector<8x128xf32> to vector<8x128xbf16>
    %c0_74 = arith.constant 0 : index
    %c0_75 = arith.constant 0 : index
    %215 = vector.load %arg3[%c0_74, %c0_75] : memref<128x384xbf16, #tpu.memory_space<vmem>>, vector<128x384xbf16>
    %cst_76 = arith.constant dense<0.000000e+00> : vector<8x384xf32>
    %216 = tpu.matmul %214, %215, %cst_76 {dimension_numbers = #tpu.dot_dimension_numbers<[1], [0], [0], [1], [0, 0, 1, 1], [], []>} : vector<8x128xbf16>, vector<128x384xbf16>, vector<8x384xf32> -> vector<8x384xf32>
    %c6 = arith.constant 6 : index
    %c0_77 = arith.constant 0 : index
    %c0_78 = arith.constant 0 : index
    %217 = vector.load %arg1[%c6, %c0_77, %c0_78] : memref<8x8x384xf32, #tpu.memory_space<vmem>>, vector<1x8x384xf32>
    %218 = vector.shape_cast %217 : vector<1x8x384xf32> to vector<8x384xf32>
    %219 = vector.extract_strided_slice %218 {offsets = [0, 0], sizes = [8, 128], strides = [1, 1]} : vector<8x384xf32> to vector<8x128xf32>
    %220 = vector.extract_strided_slice %216 {offsets = [0, 0], sizes = [8, 128], strides = [1, 1]} : vector<8x384xf32> to vector<8x128xf32>
    %221 = arith.addf %219, %220 : vector<8x128xf32>
    %222 = arith.negf %221 : vector<8x128xf32>
    %223 = math.exp %222 : vector<8x128xf32>
    %cst_79 = arith.constant 1.000000e+00 : f32
    %224 = vector.broadcast %cst_79 : f32 to vector<8x128xf32>
    %225 = arith.addf %224, %223 : vector<8x128xf32>
    %226 = arith.divf %224, %225 : vector<8x128xf32>
    %227 = vector.extract_strided_slice %218 {offsets = [0, 128], sizes = [8, 128], strides = [1, 1]} : vector<8x384xf32> to vector<8x128xf32>
    %228 = vector.extract_strided_slice %216 {offsets = [0, 128], sizes = [8, 128], strides = [1, 1]} : vector<8x384xf32> to vector<8x128xf32>
    %229 = arith.addf %227, %228 : vector<8x128xf32>
    %230 = arith.negf %229 : vector<8x128xf32>
    %231 = math.exp %230 : vector<8x128xf32>
    %cst_80 = arith.constant 1.000000e+00 : f32
    %232 = vector.broadcast %cst_80 : f32 to vector<8x128xf32>
    %233 = arith.addf %232, %231 : vector<8x128xf32>
    %234 = arith.divf %232, %233 : vector<8x128xf32>
    %235 = vector.extract_strided_slice %218 {offsets = [0, 256], sizes = [8, 128], strides = [1, 1]} : vector<8x384xf32> to vector<8x128xf32>
    %236 = vector.extract_strided_slice %216 {offsets = [0, 256], sizes = [8, 128], strides = [1, 1]} : vector<8x384xf32> to vector<8x128xf32>
    %c0_81 = arith.constant 0 : index
    %c0_82 = arith.constant 0 : index
    %237 = vector.load %arg4[%c0_81, %c0_82] : memref<1x128xf32, #tpu.memory_space<vmem>>, vector<1x128xf32>
    %238 = vector.broadcast %237 : vector<1x128xf32> to vector<8x128xf32>
    %239 = arith.addf %236, %238 : vector<8x128xf32>
    %240 = arith.mulf %226, %239 : vector<8x128xf32>
    %241 = arith.addf %235, %240 : vector<8x128xf32>
    %242 = math.tanh %241 : vector<8x128xf32>
    %243 = arith.subf %210, %242 : vector<8x128xf32>
    %244 = arith.mulf %234, %243 : vector<8x128xf32>
    %245 = arith.addf %242, %244 : vector<8x128xf32>
    %c6_83 = arith.constant 6 : index
    %c0_84 = arith.constant 0 : index
    %c0_85 = arith.constant 0 : index
    %246 = vector.load %arg5[%c6_83, %c0_84, %c0_85] : memref<8x8x128xf32, #tpu.memory_space<vmem>>, vector<1x8x128xf32>
    %247 = vector.shape_cast %246 : vector<1x8x128xf32> to vector<8x128xf32>
    %248 = vector.shape_cast %245 : vector<8x128xf32> to vector<1x8x128xf32>
    tpu.vector_store %arg5[%c6_83, %c0_84, %c0_85], %248 {strides = array<i32>} : memref<8x8x128xf32, #tpu.memory_space<vmem>>, vector<1x8x128xf32>,
    %249 = arith.truncf %245 : vector<8x128xf32> to vector<8x128xbf16>
    %c0_86 = arith.constant 0 : index
    %c0_87 = arith.constant 0 : index
    %250 = vector.load %arg3[%c0_86, %c0_87] : memref<128x384xbf16, #tpu.memory_space<vmem>>, vector<128x384xbf16>
    %cst_88 = arith.constant dense<0.000000e+00> : vector<8x384xf32>
    %251 = tpu.matmul %249, %250, %cst_88 {dimension_numbers = #tpu.dot_dimension_numbers<[1], [0], [0], [1], [0, 0, 1, 1], [], []>} : vector<8x128xbf16>, vector<128x384xbf16>, vector<8x384xf32> -> vector<8x384xf32>
    %c7 = arith.constant 7 : index
    %c0_89 = arith.constant 0 : index
    %c0_90 = arith.constant 0 : index
    %252 = vector.load %arg1[%c7, %c0_89, %c0_90] : memref<8x8x384xf32, #tpu.memory_space<vmem>>, vector<1x8x384xf32>
    %253 = vector.shape_cast %252 : vector<1x8x384xf32> to vector<8x384xf32>
    %254 = vector.extract_strided_slice %253 {offsets = [0, 0], sizes = [8, 128], strides = [1, 1]} : vector<8x384xf32> to vector<8x128xf32>
    %255 = vector.extract_strided_slice %251 {offsets = [0, 0], sizes = [8, 128], strides = [1, 1]} : vector<8x384xf32> to vector<8x128xf32>
    %256 = arith.addf %254, %255 : vector<8x128xf32>
    %257 = arith.negf %256 : vector<8x128xf32>
    %258 = math.exp %257 : vector<8x128xf32>
    %cst_91 = arith.constant 1.000000e+00 : f32
    %259 = vector.broadcast %cst_91 : f32 to vector<8x128xf32>
    %260 = arith.addf %259, %258 : vector<8x128xf32>
    %261 = arith.divf %259, %260 : vector<8x128xf32>
    %262 = vector.extract_strided_slice %253 {offsets = [0, 128], sizes = [8, 128], strides = [1, 1]} : vector<8x384xf32> to vector<8x128xf32>
    %263 = vector.extract_strided_slice %251 {offsets = [0, 128], sizes = [8, 128], strides = [1, 1]} : vector<8x384xf32> to vector<8x128xf32>
    %264 = arith.addf %262, %263 : vector<8x128xf32>
    %265 = arith.negf %264 : vector<8x128xf32>
    %266 = math.exp %265 : vector<8x128xf32>
    %cst_92 = arith.constant 1.000000e+00 : f32
    %267 = vector.broadcast %cst_92 : f32 to vector<8x128xf32>
    %268 = arith.addf %267, %266 : vector<8x128xf32>
    %269 = arith.divf %267, %268 : vector<8x128xf32>
    %270 = vector.extract_strided_slice %253 {offsets = [0, 256], sizes = [8, 128], strides = [1, 1]} : vector<8x384xf32> to vector<8x128xf32>
    %271 = vector.extract_strided_slice %251 {offsets = [0, 256], sizes = [8, 128], strides = [1, 1]} : vector<8x384xf32> to vector<8x128xf32>
    %c0_93 = arith.constant 0 : index
    %c0_94 = arith.constant 0 : index
    %272 = vector.load %arg4[%c0_93, %c0_94] : memref<1x128xf32, #tpu.memory_space<vmem>>, vector<1x128xf32>
    %273 = vector.broadcast %272 : vector<1x128xf32> to vector<8x128xf32>
    %274 = arith.addf %271, %273 : vector<8x128xf32>
    %275 = arith.mulf %261, %274 : vector<8x128xf32>
    %276 = arith.addf %270, %275 : vector<8x128xf32>
    %277 = math.tanh %276 : vector<8x128xf32>
    %278 = arith.subf %245, %277 : vector<8x128xf32>
    %279 = arith.mulf %269, %278 : vector<8x128xf32>
    %280 = arith.addf %277, %279 : vector<8x128xf32>
    %c7_95 = arith.constant 7 : index
    %c0_96 = arith.constant 0 : index
    %c0_97 = arith.constant 0 : index
    %281 = vector.load %arg5[%c7_95, %c0_96, %c0_97] : memref<8x8x128xf32, #tpu.memory_space<vmem>>, vector<1x8x128xf32>
    %282 = vector.shape_cast %281 : vector<1x8x128xf32> to vector<8x128xf32>
    %283 = vector.shape_cast %280 : vector<8x128xf32> to vector<1x8x128xf32>
    tpu.vector_store %arg5[%c7_95, %c0_96, %c0_97], %283 {strides = array<i32>} : memref<8x8x128xf32, #tpu.memory_space<vmem>>, vector<1x8x128xf32>,
    %c0_98 = arith.constant 0 : index
    %c0_99 = arith.constant 0 : index
    %284 = vector.load %arg6[%c0_98, %c0_99] : memref<8x128xf32, #tpu.memory_space<vmem>>, vector<8x128xf32>
    tpu.vector_store %arg6[%c0_98, %c0_99], %280 {strides = array<i32>} : memref<8x128xf32, #tpu.memory_space<vmem>>, vector<8x128xf32>,
    return
  }
  func.func @transform_0(%arg0: i32) -> (i32, i32, i32) {
    %c0_i32 = arith.constant 0 : i32
    %c0_i32_0 = arith.constant 0 : i32
    %c0_i32_1 = arith.constant 0 : i32
    return %arg0, %c0_i32, %c0_i32_0 : i32, i32, i32
  }
  func.func @transform_1(%arg0: i32) -> (i32, i32) {
    %c0_i32 = arith.constant 0 : i32
    %c0_i32_0 = arith.constant 0 : i32
    %c0_i32_1 = arith.constant 0 : i32
    return %c0_i32, %c0_i32_0 : i32, i32
  }
  func.func @transform_2(%arg0: i32) -> (i32, i32) {
    %c0_i32 = arith.constant 0 : i32
    %c0_i32_0 = arith.constant 0 : i32
    %c0_i32_1 = arith.constant 0 : i32
    return %c0_i32, %c0_i32_0 : i32, i32
  }
  func.func @transform_3(%arg0: i32) -> (i32, i32) {
    %c0_i32 = arith.constant 0 : i32
    %c0_i32_0 = arith.constant 0 : i32
    %c0_i32_1 = arith.constant 0 : i32
    return %c0_i32, %c0_i32_0 : i32, i32
  }
  func.func @transform_4(%arg0: i32) -> (i32, i32, i32) {
    %c0_i32 = arith.constant 0 : i32
    %c0_i32_0 = arith.constant 0 : i32
    %c0_i32_1 = arith.constant 0 : i32
    return %arg0, %c0_i32, %c0_i32_0 : i32, i32, i32
  }
}

</mosaic_0001>

<llo_original>
// kernel: seq2seq_forward.7
$region0: #{seq2seq_forward.7}
  #allocation0 [shape = 'u32[]', space=smem, size = 0x4, offset = 0x4, fixed_abs, tag = 'smem constant byte address 0x4 - core index']
  #allocation1 [shape = 'u32[72,128]{1,0:T(1,128)}', space=vmem, size = 0x9000, scoped, tag = 'internal scratch']
  %s0 = inlined_call_operand.vmem [shape: f32[64,32], index: 0, kind: input, shape index: {}]
  %s1 = inlined_call_operand.vmem [shape: bf16[32,384], index: 1, kind: input, shape index: {}]
  %s2 = inlined_call_operand.vmem [shape: f32[1,384], index: 2, kind: input, shape index: {}]
  %s3 = inlined_call_operand.vmem [shape: f32[64,384], index: 3, kind: output, shape index: {}]
  %s4 = sld [smem:[#allocation0]]
  $region22: #{seq2seq_forward.7} parent=0
    _
  %s6 = ssub.s32 1, %s4
  %s7 = scalar_select 0, %s6, %s4
  // Predicated region
  $region2: #{seq2seq_forward.7} parent=0 // pred_check
    _
  $region3: #{seq2seq_forward.7} parent=0 // pred_check_branch
    %9 = sbr.rel (0) target = $region5
  $region4: #{seq2seq_forward.7} parent=0 // pred_region
    _
  $region5: #{seq2seq_forward.7} parent=0 // pred_fallthru
    _
  // Predicated region
  $region6: #{seq2seq_forward.7} parent=0 // pred_check
    _
  $region7: #{seq2seq_forward.7} parent=0 // pred_check_branch
    %11 = sbr.rel (0) target = $region9
  $region8: #{seq2seq_forward.7} parent=0 // pred_region
    _
  $region9: #{seq2seq_forward.7} parent=0 // pred_fallthru
    _
  // Predicated region
  $region10: #{seq2seq_forward.7} parent=0 // pred_check
    _
  $region11: #{seq2seq_forward.7} parent=0 // pred_check_branch
    %13 = sbr.rel (0) target = $region13
  $region12: #{seq2seq_forward.7} parent=0 // pred_region
    _
  $region13: #{seq2seq_forward.7} parent=0 // pred_fallthru
    _
  %v15 = vld [vmem:[%s0] sm:$0xff]
  %v16 = vld [vmem:[%s0 + $0x8] sm:$0xff]
  %v17 = vld [vmem:[%s0 + $0x10] sm:$0xff]
  %v18 = vld [vmem:[%s0 + $0x18] sm:$0xff]
  %v19 = vld [vmem:[%s0 + $0x20] sm:$0xff]
  %v20 = vld [vmem:[%s0 + $0x28] sm:$0xff]
  %v21 = vld [vmem:[%s0 + $0x30] sm:$0xff]
  %v22 = vld [vmem:[%s0 + $0x38] sm:$0xff]
  %v23 = vpack.c.bf16 %v16, %v15
  %v24 = vpack.c.bf16 %v18, %v17
  %v25 = vpack.c.bf16 %v20, %v19
  %v26 = vpack.c.bf16 %v22, %v21
  %v27 = vld [vmem:[%s1] sm:$0xff]
  %v28 = vld [vmem:[%s1 + $0x8] sm:$0xf]
  %v29 = vld [vmem:[%s1 + $0xc] sm:$0xff]
  %v30 = vld [vmem:[%s1 + $0x14] sm:$0xf]
  %v31 = vld [vmem:[%s1 + $0x18] sm:$0xff]
  %v32 = vld [vmem:[%s1 + $0x20] sm:$0xf]
  %v33 = vld [vmem:[%s1 + $0x24] sm:$0xff]
  %v34 = vld [vmem:[%s1 + $0x2c] sm:$0xf]
  %v35 = vld [vmem:[%s2] sm:$0x7]
  %v37 = vperm.slane %v35, 0
  %v38 = vperm.slane %v35, 1
  %v39 = vperm.slane %v35, 2
  %v51 = vunpack.c.l.b16 %v27
  %v52 = vunpack.c.h.b16 %v27
  %v53 = vunpack.c.l.b16 %v28
  %v54 = vunpack.c.l.b16 %v29
  %v55 = vunpack.c.h.b16 %v29
  %v56 = vunpack.c.l.b16 %v30
  %v57 = vunpack.c.l.b16 %v31
  %v58 = vunpack.c.h.b16 %v31
  %v59 = vunpack.c.l.b16 %v32
  %v60 = vunpack.c.l.b16 %v33
  %v61 = vunpack.c.h.b16 %v33
  %v62 = vunpack.c.l.b16 %v34
  %v63 = vpack.c.b16 %v54, %v51
  %v64 = vpack.c.b16 %v55, %v52
  %v65 = vpack.c.b16 %v56, %v53
  %v66 = vpack.c.b16 %v60, %v57
  %v67 = vpack.c.b16 %v61, %v58
  %v68 = vpack.c.b16 %v62, %v59
  %vm75 = vcmask 261120
  %v77 = vsel %vm75, %v23, 0
  %v80 = vsel %vm75, %v24, 0
  %v83 = vsel %vm75, %v25, 0
  %v86 = vsel %vm75, %v26, 0
  %88 = vmatpush.bf16.msra.mxu0 0
  %89 = vmatpush.bf16.msra.mxu0 0
  %90 = vmatpush.bf16.msra.mxu0 0
  %91 = vmatpush.bf16.msra.mxu0 0
  %92 = vmatpush.bf16.msra.mxu0 0
  %93 = vmatpush.bf16.msra.mxu0 0
  %94 = vmatpush.bf16.msra.mxu0 %v66
  %95 = vmatpush.bf16.msra.mxu0 %v63
  %96 = vmatmul.bf16.gmra.mxu0 %v77
  %v97 = vpop.f32.mrf.mxu0
  %v98 = vadd.f32 %v37, %v97
  %v99 = vpop.f32.mrf.mxu0
  %v100 = vadd.f32 %v37, %v99
  %101 = vmatmul.bf16.gmra.mxu0 %v80
  %v102 = vpop.f32.mrf.mxu0
  %v103 = vadd.f32 %v37, %v102
  %v104 = vpop.f32.mrf.mxu0
  %v105 = vadd.f32 %v37, %v104
  %106 = vmatmul.bf16.gmra.mxu0 %v83
  %v107 = vpop.f32.mrf.mxu0
  %v108 = vadd.f32 %v37, %v107
  %v109 = vpop.f32.mrf.mxu0
  %v110 = vadd.f32 %v37, %v109
  %111 = vmatmul.bf16.gmra.mxu0 %v86
  %v112 = vpop.f32.mrf.mxu0
  %v113 = vadd.f32 %v37, %v112
  %v114 = vpop.f32.mrf.mxu0
  %v115 = vadd.f32 %v37, %v114
  %116 = vdwg.mxu0
  %117 = vmatpush.bf16.msra.mxu0 0
  %118 = vmatpush.bf16.msra.mxu0 0
  %119 = vmatpush.bf16.msra.mxu0 0
  %120 = vmatpush.bf16.msra.mxu0 0
  %121 = vmatpush.bf16.msra.mxu0 0
  %122 = vmatpush.bf16.msra.mxu0 0
  %123 = vmatpush.bf16.msra.mxu0 %v67
  %124 = vmatpush.bf16.msra.mxu0 %v64
  %125 = vmatmul.bf16.gmra.mxu0 %v77
  %v126 = vpop.f32.mrf.mxu0
  %v127 = vadd.f32 %v38, %v126
  %v128 = vpop.f32.mrf.mxu0
  %v129 = vadd.f32 %v38, %v128
  %130 = vmatmul.bf16.gmra.mxu0 %v80
  %v131 = vpop.f32.mrf.mxu0
  %v132 = vadd.f32 %v38, %v131
  %v133 = vpop.f32.mrf.mxu0
  %v134 = vadd.f32 %v38, %v133
  %135 = vmatmul.bf16.gmra.mxu0 %v83
  %v136 = vpop.f32.mrf.mxu0
  %v137 = vadd.f32 %v38, %v136
  %v138 = vpop.f32.mrf.mxu0
  %v139 = vadd.f32 %v38, %v138
  %140 = vmatmul.bf16.gmra.mxu0 %v86
  %v141 = vpop.f32.mrf.mxu0
  %v142 = vadd.f32 %v38, %v141
  %v143 = vpop.f32.mrf.mxu0
  %v144 = vadd.f32 %v38, %v143
  %145 = vdwg.mxu0
  %146 = vmatpush.bf16.msra.mxu0 0
  %147 = vmatpush.bf16.msra.mxu0 0
  %148 = vmatpush.bf16.msra.mxu0 0
  %149 = vmatpush.bf16.msra.mxu0 0
  %150 = vmatpush.bf16.msra.mxu0 0
  %151 = vmatpush.bf16.msra.mxu0 0
  %152 = vmatpush.bf16.msra.mxu0 %v68
  %153 = vmatpush.bf16.msra.mxu0 %v65
  %154 = vmatmul.bf16.gmra.mxu0 %v77
  %v155 = vpop.f32.mrf.mxu0
  %v156 = vadd.f32 %v39, %v155
  %v157 = vpop.f32.mrf.mxu0
  %v158 = vadd.f32 %v39, %v157
  %159 = vmatmul.bf16.gmra.mxu0 %v80
  %v160 = vpop.f32.mrf.mxu0
  %v161 = vadd.f32 %v39, %v160
  %v162 = vpop.f32.mrf.mxu0
  %v163 = vadd.f32 %v39, %v162
  %164 = vmatmul.bf16.gmra.mxu0 %v83
  %v165 = vpop.f32.mrf.mxu0
  %v166 = vadd.f32 %v39, %v165
  %v167 = vpop.f32.mrf.mxu0
  %v168 = vadd.f32 %v39, %v167
  %169 = vmatmul.bf16.gmra.mxu0 %v86
  %v170 = vpop.f32.mrf.mxu0
  %v171 = vadd.f32 %v39, %v170
  %v172 = vpop.f32.mrf.mxu0
  %v173 = vadd.f32 %v39, %v172
  %174 = vdwg.mxu0
  %175 = vst [vmem:[%s3] sm:$0xff] %v98
  %176 = vst [vmem:[%s3 + $0x8] sm:$0xff] %v127
  %177 = vst [vmem:[%s3 + $0x10] sm:$0xff] %v156
  %178 = vst [vmem:[%s3 + $0x18] sm:$0xff] %v100
  %179 = vst [vmem:[%s3 + $0x20] sm:$0xff] %v129
  %180 = vst [vmem:[%s3 + $0x28] sm:$0xff] %v158
  %181 = vst [vmem:[%s3 + $0x30] sm:$0xff] %v103
  %182 = vst [vmem:[%s3 + $0x38] sm:$0xff] %v132
  %183 = vst [vmem:[%s3 + $0x40] sm:$0xff] %v161
  %184 = vst [vmem:[%s3 + $0x48] sm:$0xff] %v105
  %185 = vst [vmem:[%s3 + $0x50] sm:$0xff] %v134
  %186 = vst [vmem:[%s3 + $0x58] sm:$0xff] %v163
  %187 = vst [vmem:[%s3 + $0x60] sm:$0xff] %v108
  %188 = vst [vmem:[%s3 + $0x68] sm:$0xff] %v137
  %189 = vst [vmem:[%s3 + $0x70] sm:$0xff] %v166
  %190 = vst [vmem:[%s3 + $0x78] sm:$0xff] %v110
  %191 = vst [vmem:[%s3 + $0x80] sm:$0xff] %v139
  %192 = vst [vmem:[%s3 + $0x88] sm:$0xff] %v168
  %193 = vst [vmem:[%s3 + $0x90] sm:$0xff] %v113
  %194 = vst [vmem:[%s3 + $0x98] sm:$0xff] %v142
  %195 = vst [vmem:[%s3 + $0xa0] sm:$0xff] %v171
  %196 = vst [vmem:[%s3 + $0xa8] sm:$0xff] %v115
  %197 = vst [vmem:[%s3 + $0xb0] sm:$0xff] %v144
  %198 = vst [vmem:[%s3 + $0xb8] sm:$0xff] %v173
  // Predicated region
  $region14: #{seq2seq_forward.7} parent=0 // pred_check
    _
  $region15: #{seq2seq_forward.7} parent=0 // pred_check_branch
    %200 = sbr.rel (0) target = $region17
  $region16: #{seq2seq_forward.7} parent=0 // pred_region
    _
  $region17: #{seq2seq_forward.7} parent=0 // pred_fallthru
    _
  // Predicated region
  $region18: #{seq2seq_forward.7} parent=0 // pred_check
    _
  $region19: #{seq2seq_forward.7} parent=0 // pred_check_branch
    %202 = sbr.rel (0) target = $region21
  $region20: #{seq2seq_forward.7} parent=0 // pred_region
    _
  $region21: #{seq2seq_forward.7} parent=0 // pred_fallthru
    _

// kernel: seq2seq_forward.9
$region0: #{seq2seq_forward.9}
  #allocation0 [shape = 'u32[]', space=smem, size = 0x4, offset = 0x4, fixed_abs, tag = 'smem constant byte address 0x4 - core index']
  #allocation1 [shape = 'u32[72,128]{1,0:T(1,128)}', space=vmem, size = 0x9000, scoped, tag = 'internal scratch']
  %s0 = inlined_call_operand.vmem [shape: f32[64,128], index: 0, kind: input, shape index: {}]
  %s1 = inlined_call_operand.vmem [shape: bf16[128,256], index: 1, kind: input, shape index: {}]
  %s2 = inlined_call_operand.vmem [shape: f32[1,256], index: 2, kind: input, shape index: {}]
  %s3 = inlined_call_operand.vmem [shape: f32[64,256], index: 3, kind: output, shape index: {}]
  %s4 = sld [smem:[#allocation0]]
  $region22: #{seq2seq_forward.9} parent=0
    _
  %s6 = ssub.s32 1, %s4
  %s7 = scalar_select 0, %s6, %s4
  // Predicated region
  $region2: #{seq2seq_forward.9} parent=0 // pred_check
    _
  $region3: #{seq2seq_forward.9} parent=0 // pred_check_branch
    %9 = sbr.rel (0) target = $region5
  $region4: #{seq2seq_forward.9} parent=0 // pred_region
    _
  $region5: #{seq2seq_forward.9} parent=0 // pred_fallthru
    _
  // Predicated region
  $region6: #{seq2seq_forward.9} parent=0 // pred_check
    _
  $region7: #{seq2seq_forward.9} parent=0 // pred_check_branch
    %11 = sbr.rel (0) target = $region9
  $region8: #{seq2seq_forward.9} parent=0 // pred_region
    _
  $region9: #{seq2seq_forward.9} parent=0 // pred_fallthru
    _
  // Predicated region
  $region10: #{seq2seq_forward.9} parent=0 // pred_check
    _
  $region11: #{seq2seq_forward.9} parent=0 // pred_check_branch
    %13 = sbr.rel (0) target = $region13
  $region12: #{seq2seq_forward.9} parent=0 // pred_region
    _
  $region13: #{seq2seq_forward.9} parent=0 // pred_fallthru
    _
  %v14 = vld [vmem:[%s0] sm:$0xff]
  %v15 = vld [vmem:[%s0 + $0x8] sm:$0xff]
  %v16 = vld [vmem:[%s0 + $0x10] sm:$0xff]
  %v17 = vld [vmem:[%s0 + $0x18] sm:$0xff]
  %v18 = vld [vmem:[%s0 + $0x20] sm:$0xff]
  %v19 = vld [vmem:[%s0 + $0x28] sm:$0xff]
  %v20 = vld [vmem:[%s0 + $0x30] sm:$0xff]
  %v21 = vld [vmem:[%s0 + $0x38] sm:$0xff]
  %v22 = vpack.c.bf16 %v15, %v14
  %v23 = vpack.c.bf16 %v17, %v16
  %v24 = vpack.c.bf16 %v19, %v18
  %v25 = vpack.c.bf16 %v21, %v20
  %v26 = vld [vmem:[%s1] sm:$0xff]
  %v27 = vld [vmem:[%s1 + $0x8] sm:$0xff]
  %v28 = vld [vmem:[%s1 + $0x10] sm:$0xff]
  %v29 = vld [vmem:[%s1 + $0x18] sm:$0xff]
  %v30 = vld [vmem:[%s1 + $0x20] sm:$0xff]
  %v31 = vld [vmem:[%s1 + $0x28] sm:$0xff]
  %v32 = vld [vmem:[%s1 + $0x30] sm:$0xff]
  %v33 = vld [vmem:[%s1 + $0x38] sm:$0xff]
  %v34 = vld [vmem:[%s1 + $0x40] sm:$0xff]
  %v35 = vld [vmem:[%s1 + $0x48] sm:$0xff]
  %v36 = vld [vmem:[%s1 + $0x50] sm:$0xff]
  %v37 = vld [vmem:[%s1 + $0x58] sm:$0xff]
  %v38 = vld [vmem:[%s1 + $0x60] sm:$0xff]
  %v39 = vld [vmem:[%s1 + $0x68] sm:$0xff]
  %v40 = vld [vmem:[%s1 + $0x70] sm:$0xff]
  %v41 = vld [vmem:[%s1 + $0x78] sm:$0xff]
  %v42 = vld [vmem:[%s2] sm:$0x3]
  %v44 = vperm.slane %v42, 0
  %v45 = vperm.slane %v42, 1
  %v64 = vunpack.c.l.b16 %v26
  %v65 = vunpack.c.h.b16 %v26
  %v66 = vunpack.c.l.b16 %v27
  %v67 = vunpack.c.h.b16 %v27
  %v68 = vunpack.c.l.b16 %v28
  %v69 = vunpack.c.h.b16 %v28
  %v70 = vunpack.c.l.b16 %v29
  %v71 = vunpack.c.h.b16 %v29
  %v72 = vunpack.c.l.b16 %v30
  %v73 = vunpack.c.h.b16 %v30
  %v74 = vunpack.c.l.b16 %v31
  %v75 = vunpack.c.h.b16 %v31
  %v76 = vunpack.c.l.b16 %v32
  %v77 = vunpack.c.h.b16 %v32
  %v78 = vunpack.c.l.b16 %v33
  %v79 = vunpack.c.h.b16 %v33
  %v80 = vunpack.c.l.b16 %v34
  %v81 = vunpack.c.h.b16 %v34
  %v82 = vunpack.c.l.b16 %v35
  %v83 = vunpack.c.h.b16 %v35
  %v84 = vunpack.c.l.b16 %v36
  %v85 = vunpack.c.h.b16 %v36
  %v86 = vunpack.c.l.b16 %v37
  %v87 = vunpack.c.h.b16 %v37
  %v88 = vunpack.c.l.b16 %v38
  %v89 = vunpack.c.h.b16 %v38
  %v90 = vunpack.c.l.b16 %v39
  %v91 = vunpack.c.h.b16 %v39
  %v92 = vunpack.c.l.b16 %v40
  %v93 = vunpack.c.h.b16 %v40
  %v94 = vunpack.c.l.b16 %v41
  %v95 = vunpack.c.h.b16 %v41
  %v96 = vpack.c.b16 %v66, %v64
  %v97 = vpack.c.b16 %v67, %v65
  %v98 = vpack.c.b16 %v70, %v68
  %v99 = vpack.c.b16 %v71, %v69
  %v100 = vpack.c.b16 %v74, %v72
  %v101 = vpack.c.b16 %v75, %v73
  %v102 = vpack.c.b16 %v78, %v76
  %v103 = vpack.c.b16 %v79, %v77
  %v104 = vpack.c.b16 %v82, %v80
  %v105 = vpack.c.b16 %v83, %v81
  %v106 = vpack.c.b16 %v86, %v84
  %v107 = vpack.c.b16 %v87, %v85
  %v108 = vpack.c.b16 %v90, %v88
  %v109 = vpack.c.b16 %v91, %v89
  %v110 = vpack.c.b16 %v94, %v92
  %v111 = vpack.c.b16 %v95, %v93
  %128 = vmatpush.bf16.msra.mxu0 %v110
  %129 = vmatpush.bf16.msra.mxu0 %v108
  %130 = vmatpush.bf16.msra.mxu0 %v106
  %131 = vmatpush.bf16.msra.mxu0 %v104
  %132 = vmatpush.bf16.msra.mxu0 %v102
  %133 = vmatpush.bf16.msra.mxu0 %v100
  %134 = vmatpush.bf16.msra.mxu0 %v98
  %135 = vmatpush.bf16.msra.mxu0 %v96
  %136 = vmatmul.bf16.gmra.mxu0 %v22
  %v137 = vpop.f32.mrf.mxu0
  %v138 = vadd.f32 %v44, %v137
  %v139 = vpop.f32.mrf.mxu0
  %v140 = vadd.f32 %v44, %v139
  %141 = vmatmul.bf16.gmra.mxu0 %v23
  %v142 = vpop.f32.mrf.mxu0
  %v143 = vadd.f32 %v44, %v142
  %v144 = vpop.f32.mrf.mxu0
  %v145 = vadd.f32 %v44, %v144
  %146 = vmatmul.bf16.gmra.mxu0 %v24
  %v147 = vpop.f32.mrf.mxu0
  %v148 = vadd.f32 %v44, %v147
  %v149 = vpop.f32.mrf.mxu0
  %v150 = vadd.f32 %v44, %v149
  %151 = vmatmul.bf16.gmra.mxu0 %v25
  %v152 = vpop.f32.mrf.mxu0
  %v153 = vadd.f32 %v44, %v152
  %v154 = vpop.f32.mrf.mxu0
  %v155 = vadd.f32 %v44, %v154
  %156 = vdwg.mxu0
  %157 = vmatpush.bf16.msra.mxu0 %v111
  %158 = vmatpush.bf16.msra.mxu0 %v109
  %159 = vmatpush.bf16.msra.mxu0 %v107
  %160 = vmatpush.bf16.msra.mxu0 %v105
  %161 = vmatpush.bf16.msra.mxu0 %v103
  %162 = vmatpush.bf16.msra.mxu0 %v101
  %163 = vmatpush.bf16.msra.mxu0 %v99
  %164 = vmatpush.bf16.msra.mxu0 %v97
  %165 = vmatmul.bf16.gmra.mxu0 %v22
  %v166 = vpop.f32.mrf.mxu0
  %v167 = vadd.f32 %v45, %v166
  %v168 = vpop.f32.mrf.mxu0
  %v169 = vadd.f32 %v45, %v168
  %170 = vmatmul.bf16.gmra.mxu0 %v23
  %v171 = vpop.f32.mrf.mxu0
  %v172 = vadd.f32 %v45, %v171
  %v173 = vpop.f32.mrf.mxu0
  %v174 = vadd.f32 %v45, %v173
  %175 = vmatmul.bf16.gmra.mxu0 %v24
  %v176 = vpop.f32.mrf.mxu0
  %v177 = vadd.f32 %v45, %v176
  %v178 = vpop.f32.mrf.mxu0
  %v179 = vadd.f32 %v45, %v178
  %180 = vmatmul.bf16.gmra.mxu0 %v25
  %v181 = vpop.f32.mrf.mxu0
  %v182 = vadd.f32 %v45, %v181
  %v183 = vpop.f32.mrf.mxu0
  %v184 = vadd.f32 %v45, %v183
  %185 = vdwg.mxu0
  %v186 = vmax.f32 %v138, %v167
  %187 = vmax.xlane.f32.xlu0 %v186
  %v188 = vpop.xlane.xlu0 %187
  %v189 = vmax.f32 %v140, %v169
  %190 = vmax.xlane.f32.xlu0 %v189
  %v191 = vpop.xlane.xlu0 %190
  %v192 = vmax.f32 %v143, %v172
  %193 = vmax.xlane.f32.xlu0 %v192
  %v194 = vpop.xlane.xlu0 %193
  %v195 = vmax.f32 %v145, %v174
  %196 = vmax.xlane.f32.xlu0 %v195
  %v197 = vpop.xlane.xlu0 %196
  %v198 = vmax.f32 %v148, %v177
  %199 = vmax.xlane.f32.xlu0 %v198
  %v200 = vpop.xlane.xlu0 %199
  %v201 = vmax.f32 %v150, %v179
  %202 = vmax.xlane.f32.xlu0 %v201
  %v203 = vpop.xlane.xlu0 %202
  %v204 = vmax.f32 %v153, %v182
  %205 = vmax.xlane.f32.xlu0 %v204
  %v206 = vpop.xlane.xlu0 %205
  %v207 = vmax.f32 %v155, %v184
  %208 = vmax.xlane.f32.xlu0 %v207
  %v209 = vpop.xlane.xlu0 %208
  %v210 = vsub.f32 %v138, %v188
  %v211 = vsub.f32 %v167, %v188
  %v212 = vsub.f32 %v140, %v191
  %v213 = vsub.f32 %v169, %v191
  %v214 = vsub.f32 %v143, %v194
  %v215 = vsub.f32 %v172, %v194
  %v216 = vsub.f32 %v145, %v197
  %v217 = vsub.f32 %v174, %v197
  %v218 = vsub.f32 %v148, %v200
  %v219 = vsub.f32 %v177, %v200
  %v220 = vsub.f32 %v150, %v203
  %v221 = vsub.f32 %v179, %v203
  %v222 = vsub.f32 %v153, %v206
  %v223 = vsub.f32 %v182, %v206
  %v224 = vsub.f32 %v155, %v209
  %v225 = vsub.f32 %v184, %v209
  %v226 = vmul.f32 %v210, 1.442695
  %v227 = vpow.pop %v226
  %v228 = vmul.f32 %v211, 1.442695
  %v229 = vpow.pop %v228
  %v230 = vmul.f32 %v212, 1.442695
  %v231 = vpow.pop %v230
  %v232 = vmul.f32 %v213, 1.442695
  %v233 = vpow.pop %v232
  %v234 = vmul.f32 %v214, 1.442695
  %v235 = vpow.pop %v234
  %v236 = vmul.f32 %v215, 1.442695
  %v237 = vpow.pop %v236
  %v238 = vmul.f32 %v216, 1.442695
  %v239 = vpow.pop %v238
  %v240 = vmul.f32 %v217, 1.442695
  %v241 = vpow.pop %v240
  %v242 = vmul.f32 %v218, 1.442695
  %v243 = vpow.pop %v242
  %v244 = vmul.f32 %v219, 1.442695
  %v245 = vpow.pop %v244
  %v246 = vmul.f32 %v220, 1.442695
  %v247 = vpow.pop %v246
  %v248 = vmul.f32 %v221, 1.442695
  %v249 = vpow.pop %v248
  %v250 = vmul.f32 %v222, 1.442695
  %v251 = vpow.pop %v250
  %v252 = vmul.f32 %v223, 1.442695
  %v253 = vpow.pop %v252
  %v254 = vmul.f32 %v224, 1.442695
  %v255 = vpow.pop %v254
  %v256 = vmul.f32 %v225, 1.442695
  %v257 = vpow.pop %v256
  %v258 = vadd.f32 %v227, %v229
  %259 = vadd.xlane.f32.xlu0 %v258
  %v260 = vpop.xlane.xlu0 %259
  %v261 = vadd.f32 %v231, %v233
  %262 = vadd.xlane.f32.xlu0 %v261
  %v263 = vpop.xlane.xlu0 %262
  %v264 = vadd.f32 %v235, %v237
  %265 = vadd.xlane.f32.xlu0 %v264
  %v266 = vpop.xlane.xlu0 %265
  %v267 = vadd.f32 %v239, %v241
  %268 = vadd.xlane.f32.xlu0 %v267
  %v269 = vpop.xlane.xlu0 %268
  %v270 = vadd.f32 %v243, %v245
  %271 = vadd.xlane.f32.xlu0 %v270
  %v272 = vpop.xlane.xlu0 %271
  %v273 = vadd.f32 %v247, %v249
  %274 = vadd.xlane.f32.xlu0 %v273
  %v275 = vpop.xlane.xlu0 %274
  %v276 = vadd.f32 %v251, %v253
  %277 = vadd.xlane.f32.xlu0 %v276
  %v278 = vpop.xlane.xlu0 %277
  %v279 = vadd.f32 %v255, %v257
  %280 = vadd.xlane.f32.xlu0 %v279
  %v281 = vpop.xlane.xlu0 %280
  %v282 = vlog2.pop %v260
  %v283 = vmul.f32 %v282, 0.6931472
  %v284 = vlog2.pop %v263
  %v285 = vmul.f32 %v284, 0.6931472
  %v286 = vlog2.pop %v266
  %v287 = vmul.f32 %v286, 0.6931472
  %v288 = vlog2.pop %v269
  %v289 = vmul.f32 %v288, 0.6931472
  %v290 = vlog2.pop %v272
  %v291 = vmul.f32 %v290, 0.6931472
  %v292 = vlog2.pop %v275
  %v293 = vmul.f32 %v292, 0.6931472
  %v294 = vlog2.pop %v278
  %v295 = vmul.f32 %v294, 0.6931472
  %v296 = vlog2.pop %v281
  %v297 = vmul.f32 %v296, 0.6931472
  %v298 = vsub.f32 %v210, %v283
  %v299 = vsub.f32 %v211, %v283
  %v300 = vsub.f32 %v212, %v285
  %v301 = vsub.f32 %v213, %v285
  %v302 = vsub.f32 %v214, %v287
  %v303 = vsub.f32 %v215, %v287
  %v304 = vsub.f32 %v216, %v289
  %v305 = vsub.f32 %v217, %v289
  %v306 = vsub.f32 %v218, %v291
  %v307 = vsub.f32 %v219, %v291
  %v308 = vsub.f32 %v220, %v293
  %v309 = vsub.f32 %v221, %v293
  %v310 = vsub.f32 %v222, %v295
  %v311 = vsub.f32 %v223, %v295
  %v312 = vsub.f32 %v224, %v297
  %v313 = vsub.f32 %v225, %v297
  %314 = vst [vmem:[%s3] sm:$0xff] %v298
  %315 = vst [vmem:[%s3 + $0x8] sm:$0xff] %v299
  %316 = vst [vmem:[%s3 + $0x10] sm:$0xff] %v300
  %317 = vst [vmem:[%s3 + $0x18] sm:$0xff] %v301
  %318 = vst [vmem:[%s3 + $0x20] sm:$0xff] %v302
  %319 = vst [vmem:[%s3 + $0x28] sm:$0xff] %v303
  %320 = vst [vmem:[%s3 + $0x30] sm:$0xff] %v304
  %321 = vst [vmem:[%s3 + $0x38] sm:$0xff] %v305
  %322 = vst [vmem:[%s3 + $0x40] sm:$0xff] %v306
  %323 = vst [vmem:[%s3 + $0x48] sm:$0xff] %v307
  %324 = vst [vmem:[%s3 + $0x50] sm:$0xff] %v308
  %325 = vst [vmem:[%s3 + $0x58] sm:$0xff] %v309
  %326 = vst [vmem:[%s3 + $0x60] sm:$0xff] %v310
  %327 = vst [vmem:[%s3 + $0x68] sm:$0xff] %v311
  %328 = vst [vmem:[%s3 + $0x70] sm:$0xff] %v312
  %329 = vst [vmem:[%s3 + $0x78] sm:$0xff] %v313
  // Predicated region
  $region14: #{seq2seq_forward.9} parent=0 // pred_check
    _
  $region15: #{seq2seq_forward.9} parent=0 // pred_check_branch
    %331 = sbr.rel (0) target = $region17
  $region16: #{seq2seq_forward.9} parent=0 // pred_region
    _
  $region17: #{seq2seq_forward.9} parent=0 // pred_fallthru
    _
  // Predicated region
  $region18: #{seq2seq_forward.9} parent=0 // pred_check
    _
  $region19: #{seq2seq_forward.9} parent=0 // pred_check_branch
    %333 = sbr.rel (0) target = $region21
  $region20: #{seq2seq_forward.9} parent=0 // pred_region
    _
  $region21: #{seq2seq_forward.9} parent=0 // pred_fallthru
    _

// kernel: seq2seq_forward.6
$region0: #{seq2seq_forward.6}
  #allocation0 [shape = 'u32[]', space=smem, size = 0x4, offset = 0x4, fixed_abs, tag = 'smem constant byte address 0x4 - core index']
  #allocation1 [shape = 'u32[72,128]{1,0:T(1,128)}', space=vmem, size = 0x9000, scoped, tag = 'internal scratch']
  #allocation2 [shape = 'f32[8,128]{1,0:T(8,128)}', space=vmem, size = 0x1000, scoped, tag = 'scratch operand']
  %s0 = inlined_call_operand.vmem [shape: f32[8,8,384], index: 0, kind: input, shape index: {}]
  %s1 = inlined_call_operand.vmem [shape: f32[8,128], index: 1, kind: input, shape index: {}]
  %s2 = inlined_call_operand.vmem [shape: bf16[128,384], index: 2, kind: input, shape index: {}]
  %s3 = inlined_call_operand.vmem [shape: f32[1,128], index: 3, kind: input, shape index: {}]
  %s4 = inlined_call_operand.vmem [shape: f32[8,8,128], index: 4, kind: output, shape index: {}]
  %s5 = sld [smem:[#allocation0]]
  $region30: #{seq2seq_forward.6} parent=0
    _
  %s7 = ssub.s32 1, %s5
  %s8 = scalar_select 0, %s7, %s5
  // Predicated region
  $region2: #{seq2seq_forward.6} parent=0 // pred_check
    _
  $region3: #{seq2seq_forward.6} parent=0 // pred_check_branch
    %10 = sbr.rel (0) target = $region5
  $region4: #{seq2seq_forward.6} parent=0 // pred_region
    _
  $region5: #{seq2seq_forward.6} parent=0 // pred_fallthru
    _
  // Predicated region
  $region6: #{seq2seq_forward.6} parent=0 // pred_check
    _
  $region7: #{seq2seq_forward.6} parent=0 // pred_check_branch
    %12 = sbr.rel (0) target = $region9
  $region8: #{seq2seq_forward.6} parent=0 // pred_region
    _
  $region9: #{seq2seq_forward.6} parent=0 // pred_fallthru
    _
  // Predicated region
  $region10: #{seq2seq_forward.6} parent=0 // pred_check
    _
  $region11: #{seq2seq_forward.6} parent=0 // pred_check_branch
    %14 = sbr.rel (0) target = $region13
  $region12: #{seq2seq_forward.6} parent=0 // pred_region
    _
  $region13: #{seq2seq_forward.6} parent=0 // pred_fallthru
    _
  // Predicated region
  $region14: #{seq2seq_forward.6} parent=0 // pred_check
    _
  $region15: #{seq2seq_forward.6} parent=0 // pred_check_branch
    %16 = sbr.rel (0) target = $region17
  $region16: #{seq2seq_forward.6} parent=0 // pred_region
    _
  $region17: #{seq2seq_forward.6} parent=0 // pred_fallthru
    _
  %p17 = scmp.eq.s32.totalorder 0, 0
  // Predicated region
  $region18: #{seq2seq_forward.6} parent=0 // pred_check
    %p18 = pneg %p17
  $region19: #{seq2seq_forward.6} parent=0 // pred_check_branch
    %20 = sbr.rel (%p18) target = $region21
  $region20: #{seq2seq_forward.6} parent=0 // pred_region
    %v21 = vld [vmem:[%s1] sm:$0xff]
    %22 = vst [vmem:[#allocation2] sm:$0xff] %v21
  $region21: #{seq2seq_forward.6} parent=0 // pred_fallthru
    _
  %v23 = vld [vmem:[#allocation2] sm:$0xff]
  %v24 = vpack.c.bf16 %v23, %v23
  %v25 = vld [vmem:[%s2] sm:$0xff]
  %v26 = vld [vmem:[%s2 + $0x8] sm:$0xf]
  %v27 = vld [vmem:[%s2 + $0xc] sm:$0xff]
  %v28 = vld [vmem:[%s2 + $0x14] sm:$0xf]
  %v29 = vld [vmem:[%s2 + $0x18] sm:$0xff]
  %v30 = vld [vmem:[%s2 + $0x20] sm:$0xf]
  %v31 = vld [vmem:[%s2 + $0x24] sm:$0xff]
  %v32 = vld [vmem:[%s2 + $0x2c] sm:$0xf]
  %v33 = vld [vmem:[%s2 + $0x30] sm:$0xff]
  %v34 = vld [vmem:[%s2 + $0x38] sm:$0xf]
  %v35 = vld [vmem:[%s2 + $0x3c] sm:$0xff]
  %v36 = vld [vmem:[%s2 + $0x44] sm:$0xf]
  %v37 = vld [vmem:[%s2 + $0x48] sm:$0xff]
  %v38 = vld [vmem:[%s2 + $0x50] sm:$0xf]
  %v39 = vld [vmem:[%s2 + $0x54] sm:$0xff]
  %v40 = vld [vmem:[%s2 + $0x5c] sm:$0xf]
  %v41 = vld [vmem:[%s2 + $0x60] sm:$0xff]
  %v42 = vld [vmem:[%s2 + $0x68] sm:$0xf]
  %v43 = vld [vmem:[%s2 + $0x6c] sm:$0xff]
  %v44 = vld [vmem:[%s2 + $0x74] sm:$0xf]
  %v45 = vld [vmem:[%s2 + $0x78] sm:$0xff]
  %v46 = vld [vmem:[%s2 + $0x80] sm:$0xf]
  %v47 = vld [vmem:[%s2 + $0x84] sm:$0xff]
  %v48 = vld [vmem:[%s2 + $0x8c] sm:$0xf]
  %v49 = vld [vmem:[%s2 + $0x90] sm:$0xff]
  %v50 = vld [vmem:[%s2 + $0x98] sm:$0xf]
  %v51 = vld [vmem:[%s2 + $0x9c] sm:$0xff]
  %v52 = vld [vmem:[%s2 + $0xa4] sm:$0xf]
  %v53 = vld [vmem:[%s2 + $0xa8] sm:$0xff]
  %v54 = vld [vmem:[%s2 + $0xb0] sm:$0xf]
  %v55 = vld [vmem:[%s2 + $0xb4] sm:$0xff]
  %v56 = vld [vmem:[%s2 + $0xbc] sm:$0xf]
  %v89 = vunpack.c.l.b16 %v25
  %v90 = vunpack.c.h.b16 %v25
  %v91 = vunpack.c.l.b16 %v26
  %v92 = vunpack.c.l.b16 %v27
  %v93 = vunpack.c.h.b16 %v27
  %v94 = vunpack.c.l.b16 %v28
  %v95 = vunpack.c.l.b16 %v29
  %v96 = vunpack.c.h.b16 %v29
  %v97 = vunpack.c.l.b16 %v30
  %v98 = vunpack.c.l.b16 %v31
  %v99 = vunpack.c.h.b16 %v31
  %v100 = vunpack.c.l.b16 %v32
  %v101 = vunpack.c.l.b16 %v33
  %v102 = vunpack.c.h.b16 %v33
  %v103 = vunpack.c.l.b16 %v34
  %v104 = vunpack.c.l.b16 %v35
  %v105 = vunpack.c.h.b16 %v35
  %v106 = vunpack.c.l.b16 %v36
  %v107 = vunpack.c.l.b16 %v37
  %v108 = vunpack.c.h.b16 %v37
  %v109 = vunpack.c.l.b16 %v38
  %v110 = vunpack.c.l.b16 %v39
  %v111 = vunpack.c.h.b16 %v39
  %v112 = vunpack.c.l.b16 %v40
  %v113 = vunpack.c.l.b16 %v41
  %v114 = vunpack.c.h.b16 %v41
  %v115 = vunpack.c.l.b16 %v42
  %v116 = vunpack.c.l.b16 %v43
  %v117 = vunpack.c.h.b16 %v43
  %v118 = vunpack.c.l.b16 %v44
  %v119 = vunpack.c.l.b16 %v45
  %v120 = vunpack.c.h.b16 %v45
  %v121 = vunpack.c.l.b16 %v46
  %v122 = vunpack.c.l.b16 %v47
  %v123 = vunpack.c.h.b16 %v47
  %v124 = vunpack.c.l.b16 %v48
  %v125 = vunpack.c.l.b16 %v49
  %v126 = vunpack.c.h.b16 %v49
  %v127 = vunpack.c.l.b16 %v50
  %v128 = vunpack.c.l.b16 %v51
  %v129 = vunpack.c.h.b16 %v51
  %v130 = vunpack.c.l.b16 %v52
  %v131 = vunpack.c.l.b16 %v53
  %v132 = vunpack.c.h.b16 %v53
  %v133 = vunpack.c.l.b16 %v54
  %v134 = vunpack.c.l.b16 %v55
  %v135 = vunpack.c.h.b16 %v55
  %v136 = vunpack.c.l.b16 %v56
  %v137 = vpack.c.b16 %v92, %v89
  %v138 = vpack.c.b16 %v93, %v90
  %v139 = vpack.c.b16 %v94, %v91
  %v140 = vpack.c.b16 %v98, %v95
  %v141 = vpack.c.b16 %v99, %v96
  %v142 = vpack.c.b16 %v100, %v97
  %v143 = vpack.c.b16 %v104, %v101
  %v144 = vpack.c.b16 %v105, %v102
  %v145 = vpack.c.b16 %v106, %v103
  %v146 = vpack.c.b16 %v110, %v107
  %v147 = vpack.c.b16 %v111, %v108
  %v148 = vpack.c.b16 %v112, %v109
  %v149 = vpack.c.b16 %v116, %v113
  %v150 = vpack.c.b16 %v117, %v114
  %v151 = vpack.c.b16 %v118, %v115
  %v152 = vpack.c.b16 %v122, %v119
  %v153 = vpack.c.b16 %v123, %v120
  %v154 = vpack.c.b16 %v124, %v121
  %v155 = vpack.c.b16 %v128, %v125
  %v156 = vpack.c.b16 %v129, %v126
  %v157 = vpack.c.b16 %v130, %v127
  %v158 = vpack.c.b16 %v134, %v131
  %v159 = vpack.c.b16 %v135, %v132
  %v160 = vpack.c.b16 %v136, %v133
  %185 = vmatpush.bf16.msra.mxu0 %v158
  %186 = vmatpush.bf16.msra.mxu0 %v155
  %187 = vmatpush.bf16.msra.mxu0 %v152
  %188 = vmatpush.bf16.msra.mxu0 %v149
  %189 = vmatpush.bf16.msra.mxu0 %v146
  %190 = vmatpush.bf16.msra.mxu0 %v143
  %191 = vmatpush.bf16.msra.mxu0 %v140
  %192 = vmatpush.bf16.msra.mxu0 %v137
  %193 = vmatmul.bf16.gmra.mxu0 %v24
  %v194 = vpop.f32.mrf.mxu0
  %v195 = vadd.f32 0.0, %v194
  %v196 = vpop.f32.mrf.mxu0
  %197 = vdwg.mxu0
  %198 = vmatpush.bf16.msra.mxu0 %v159
  %199 = vmatpush.bf16.msra.mxu0 %v156
  %200 = vmatpush.bf16.msra.mxu0 %v153
  %201 = vmatpush.bf16.msra.mxu0 %v150
  %202 = vmatpush.bf16.msra.mxu0 %v147
  %203 = vmatpush.bf16.msra.mxu0 %v144
  %204 = vmatpush.bf16.msra.mxu0 %v141
  %205 = vmatpush.bf16.msra.mxu0 %v138
  %206 = vmatmul.bf16.gmra.mxu0 %v24
  %v207 = vpop.f32.mrf.mxu0
  %v208 = vadd.f32 0.0, %v207
  %v209 = vpop.f32.mrf.mxu0
  %210 = vdwg.mxu0
  %211 = vmatpush.bf16.msra.mxu0 %v160
  %212 = vmatpush.bf16.msra.mxu0 %v157
  %213 = vmatpush.bf16.msra.mxu0 %v154
  %214 = vmatpush.bf16.msra.mxu0 %v151
  %215 = vmatpush.bf16.msra.mxu0 %v148
  %216 = vmatpush.bf16.msra.mxu0 %v145
  %217 = vmatpush.bf16.msra.mxu0 %v142
  %218 = vmatpush.bf16.msra.mxu0 %v139
  %219 = vmatmul.bf16.gmra.mxu0 %v24
  %v220 = vpop.f32.mrf.mxu0
  %v221 = vadd.f32 0.0, %v220
  %v222 = vpop.f32.mrf.mxu0
  %223 = vdwg.mxu0
  %v224 = vld [vmem:[%s0] sm:$0xff]
  %v225 = vld [vmem:[%s0 + $0x8] sm:$0xff]
  %v226 = vld [vmem:[%s0 + $0x10] sm:$0xff]
  %v227 = vadd.f32 %v224, %v195
  %v228 = vxor.u32 %v227, 2147483648
  %v229 = vmul.f32 %v228, 1.442695
  %v230 = vpow.pop %v229
  %v231 = vadd.f32 %v230, 1.0
  %v232 = vrcp.pop %v231
  %v233 = vmul.f32 %v231, %v232
  %v234 = vsub.f32 1.0, %v233
  %v235 = vmul.f32 %v232, %v234
  %v236 = vadd.f32 %v232, %v235
  %vm237 = vweird.f32 %v231
  %vm238 = vweird.f32 %v232
  %vm239 = vmor %vm237, %vm238
  %v240 = vsel %vm239, %v232, %v236
  %v241 = vand.u32 2147483647, %v231
  %vm242 = vcmp.eq.f32.partialorder %v241, 8.507059e+37
  %v243 = vand.u32 %v231, 2147483648
  %v244 = vor.u32 1.1754944e-38, %v243
  %v245 = vsel %vm242, %v244, %v240
  %v246 = vmul.f32 1.0, %v245
  %v247 = vadd.f32 %v225, %v208
  %v248 = vxor.u32 %v247, 2147483648
  %v249 = vmul.f32 %v248, 1.442695
  %v250 = vpow.pop %v249
  %v251 = vadd.f32 %v250, 1.0
  %v252 = vrcp.pop %v251
  %v253 = vmul.f32 %v251, %v252
  %v254 = vsub.f32 1.0, %v253
  %v255 = vmul.f32 %v252, %v254
  %v256 = vadd.f32 %v252, %v255
  %vm257 = vweird.f32 %v251
  %vm258 = vweird.f32 %v252
  %vm259 = vmor %vm257, %vm258
  %v260 = vsel %vm259, %v252, %v256
  %v261 = vand.u32 2147483647, %v251
  %vm262 = vcmp.eq.f32.partialorder %v261, 8.507059e+37
  %v263 = vand.u32 %v251, 2147483648
  %v264 = vor.u32 1.1754944e-38, %v263
  %v265 = vsel %vm262, %v264, %v260
  %v266 = vmul.f32 1.0, %v265
  %v267 = vld [vmem:[%s3] sm:$0x1]
  %v269 = vperm.slane %v267, 0
  %v271 = vadd.f32 %v221, %v269
  %v272 = vmul.f32 %v246, %v271
  %v273 = vadd.f32 %v226, %v272
  %v274 = vtanh.pop %v273
  %v275 = vsub.f32 %v23, %v274
  %v276 = vmul.f32 %v266, %v275
  %v277 = vadd.f32 %v274, %v276
  %278 = vst [vmem:[%s4] sm:$0xff] %v277
  %v279 = vpack.c.bf16 %v277, %v277
  %v280 = vld [vmem:[%s2] sm:$0xff]
  %v281 = vld [vmem:[%s2 + $0x8] sm:$0xf]
  %v282 = vld [vmem:[%s2 + $0xc] sm:$0xff]
  %v283 = vld [vmem:[%s2 + $0x14] sm:$0xf]
  %v284 = vld [vmem:[%s2 + $0x18] sm:$0xff]
  %v285 = vld [vmem:[%s2 + $0x20] sm:$0xf]
  %v286 = vld [vmem:[%s2 + $0x24] sm:$0xff]
  %v287 = vld [vmem:[%s2 + $0x2c] sm:$0xf]
  %v288 = vld [vmem:[%s2 + $0x30] sm:$0xff]
  %v289 = vld [vmem:[%s2 + $0x38] sm:$0xf]
  %v290 = vld [vmem:[%s2 + $0x3c] sm:$0xff]
  %v291 = vld [vmem:[%s2 + $0x44] sm:$0xf]
  %v292 = vld [vmem:[%s2 + $0x48] sm:$0xff]
  %v293 = vld [vmem:[%s2 + $0x50] sm:$0xf]
  %v294 = vld [vmem:[%s2 + $0x54] sm:$0xff]
  %v295 = vld [vmem:[%s2 + $0x5c] sm:$0xf]
  %v296 = vld [vmem:[%s2 + $0x60] sm:$0xff]
  %v297 = vld [vmem:[%s2 + $0x68] sm:$0xf]
  %v298 = vld [vmem:[%s2 + $0x6c] sm:$0xff]
  %v299 = vld [vmem:[%s2 + $0x74] sm:$0xf]
  %v300 = vld [vmem:[%s2 + $0x78] sm:$0xff]
  %v301 = vld [vmem:[%s2 + $0x80] sm:$0xf]
  %v302 = vld [vmem:[%s2 + $0x84] sm:$0xff]
  %v303 = vld [vmem:[%s2 + $0x8c] sm:$0xf]
  %v304 = vld [vmem:[%s2 + $0x90] sm:$0xff]
  %v305 = vld [vmem:[%s2 + $0x98] sm:$0xf]
  %v306 = vld [vmem:[%s2 + $0x9c] sm:$0xff]
  %v307 = vld [vmem:[%s2 + $0xa4] sm:$0xf]
  %v308 = vld [vmem:[%s2 + $0xa8] sm:$0xff]
  %v309 = vld [vmem:[%s2 + $0xb0] sm:$0xf]
  %v310 = vld [vmem:[%s2 + $0xb4] sm:$0xff]
  %v311 = vld [vmem:[%s2 + $0xbc] sm:$0xf]
  %v344 = vunpack.c.l.b16 %v280
  %v345 = vunpack.c.h.b16 %v280
  %v346 = vunpack.c.l.b16 %v281
  %v347 = vunpack.c.l.b16 %v282
  %v348 = vunpack.c.h.b16 %v282
  %v349 = vunpack.c.l.b16 %v283
  %v350 = vunpack.c.l.b16 %v284
  %v351 = vunpack.c.h.b16 %v284
  %v352 = vunpack.c.l.b16 %v285
  %v353 = vunpack.c.l.b16 %v286
  %v354 = vunpack.c.h.b16 %v286
  %v355 = vunpack.c.l.b16 %v287
  %v356 = vunpack.c.l.b16 %v288
  %v357 = vunpack.c.h.b16 %v288
  %v358 = vunpack.c.l.b16 %v289
  %v359 = vunpack.c.l.b16 %v290
  %v360 = vunpack.c.h.b16 %v290
  %v361 = vunpack.c.l.b16 %v291
  %v362 = vunpack.c.l.b16 %v292
  %v363 = vunpack.c.h.b16 %v292
  %v364 = vunpack.c.l.b16 %v293
  %v365 = vunpack.c.l.b16 %v294
  %v366 = vunpack.c.h.b16 %v294
  %v367 = vunpack.c.l.b16 %v295
  %v368 = vunpack.c.l.b16 %v296
  %v369 = vunpack.c.h.b16 %v296
  %v370 = vunpack.c.l.b16 %v297
  %v371 = vunpack.c.l.b16 %v298
  %v372 = vunpack.c.h.b16 %v298
  %v373 = vunpack.c.l.b16 %v299
  %v374 = vunpack.c.l.b16 %v300
  %v375 = vunpack.c.h.b16 %v300
  %v376 = vunpack.c.l.b16 %v301
  %v377 = vunpack.c.l.b16 %v302
  %v378 = vunpack.c.h.b16 %v302
  %v379 = vunpack.c.l.b16 %v303
  %v380 = vunpack.c.l.b16 %v304
  %v381 = vunpack.c.h.b16 %v304
  %v382 = vunpack.c.l.b16 %v305
  %v383 = vunpack.c.l.b16 %v306
  %v384 = vunpack.c.h.b16 %v306
  %v385 = vunpack.c.l.b16 %v307
  %v386 = vunpack.c.l.b16 %v308
  %v387 = vunpack.c.h.b16 %v308
  %v388 = vunpack.c.l.b16 %v309
  %v389 = vunpack.c.l.b16 %v310
  %v390 = vunpack.c.h.b16 %v310
  %v391 = vunpack.c.l.b16 %v311
  %v392 = vpack.c.b16 %v347, %v344
  %v393 = vpack.c.b16 %v348, %v345
  %v394 = vpack.c.b16 %v349, %v346
  %v395 = vpack.c.b16 %v353, %v350
  %v396 = vpack.c.b16 %v354, %v351
  %v397 = vpack.c.b16 %v355, %v352
  %v398 = vpack.c.b16 %v359, %v356
  %v399 = vpack.c.b16 %v360, %v357
  %v400 = vpack.c.b16 %v361, %v358
  %v401 = vpack.c.b16 %v365, %v362
  %v402 = vpack.c.b16 %v366, %v363
  %v403 = vpack.c.b16 %v367, %v364
  %v404 = vpack.c.b16 %v371, %v368
  %v405 = vpack.c.b16 %v372, %v369
  %v406 = vpack.c.b16 %v373, %v370
  %v407 = vpack.c.b16 %v377, %v374
  %v408 = vpack.c.b16 %v378, %v375
  %v409 = vpack.c.b16 %v379, %v376
  %v410 = vpack.c.b16 %v383, %v380
  %v411 = vpack.c.b16 %v384, %v381
  %v412 = vpack.c.b16 %v385, %v382
  %v413 = vpack.c.b16 %v389, %v386
  %v414 = vpack.c.b16 %v390, %v387
  %v415 = vpack.c.b16 %v391, %v388
  %440 = vmatpush.bf16.msra.mxu0 %v413
  %441 = vmatpush.bf16.msra.mxu0 %v410
  %442 = vmatpush.bf16.msra.mxu0 %v407
  %443 = vmatpush.bf16.msra.mxu0 %v404
  %444 = vmatpush.bf16.msra.mxu0 %v401
  %445 = vmatpush.bf16.msra.mxu0 %v398
  %446 = vmatpush.bf16.msra.mxu0 %v395
  %447 = vmatpush.bf16.msra.mxu0 %v392
  %448 = vmatmul.bf16.gmra.mxu0 %v279
  %v449 = vpop.f32.mrf.mxu0
  %v450 = vadd.f32 0.0, %v449
  %v451 = vpop.f32.mrf.mxu0
  %452 = vdwg.mxu0
  %453 = vmatpush.bf16.msra.mxu0 %v414
  %454 = vmatpush.bf16.msra.mxu0 %v411
  %455 = vmatpush.bf16.msra.mxu0 %v408
  %456 = vmatpush.bf16.msra.mxu0 %v405
  %457 = vmatpush.bf16.msra.mxu0 %v402
  %458 = vmatpush.bf16.msra.mxu0 %v399
  %459 = vmatpush.bf16.msra.mxu0 %v396
  %460 = vmatpush.bf16.msra.mxu0 %v393
  %461 = vmatmul.bf16.gmra.mxu0 %v279
  %v462 = vpop.f32.mrf.mxu0
  %v463 = vadd.f32 0.0, %v462
  %v464 = vpop.f32.mrf.mxu0
  %465 = vdwg.mxu0
  %466 = vmatpush.bf16.msra.mxu0 %v415
  %467 = vmatpush.bf16.msra.mxu0 %v412
  %468 = vmatpush.bf16.msra.mxu0 %v409
  %469 = vmatpush.bf16.msra.mxu0 %v406
  %470 = vmatpush.bf16.msra.mxu0 %v403
  %471 = vmatpush.bf16.msra.mxu0 %v400
  %472 = vmatpush.bf16.msra.mxu0 %v397
  %473 = vmatpush.bf16.msra.mxu0 %v394
  %474 = vmatmul.bf16.gmra.mxu0 %v279
  %v475 = vpop.f32.mrf.mxu0
  %v476 = vadd.f32 0.0, %v475
  %v477 = vpop.f32.mrf.mxu0
  %478 = vdwg.mxu0
  %s479 = scalar_lea.vmem %s0, 24
  %v480 = vld [vmem:[%s479] sm:$0xff]
  %v481 = vld [vmem:[%s479 + $0x8] sm:$0xff]
  %v482 = vld [vmem:[%s479 + $0x10] sm:$0xff]
  %v483 = vadd.f32 %v480, %v450
  %v484 = vxor.u32 %v483, 2147483648
  %v485 = vmul.f32 %v484, 1.442695
  %v486 = vpow.pop %v485
  %v487 = vadd.f32 %v486, 1.0
  %v488 = vrcp.pop %v487
  %v489 = vmul.f32 %v487, %v488
  %v490 = vsub.f32 1.0, %v489
  %v491 = vmul.f32 %v488, %v490
  %v492 = vadd.f32 %v488, %v491
  %vm493 = vweird.f32 %v487
  %vm494 = vweird.f32 %v488
  %vm495 = vmor %vm493, %vm494
  %v496 = vsel %vm495, %v488, %v492
  %v497 = vand.u32 2147483647, %v487
  %vm498 = vcmp.eq.f32.partialorder %v497, 8.507059e+37
  %v499 = vand.u32 %v487, 2147483648
  %v500 = vor.u32 1.1754944e-38, %v499
  %v501 = vsel %vm498, %v500, %v496
  %v502 = vmul.f32 1.0, %v501
  %v503 = vadd.f32 %v481, %v463
  %v504 = vxor.u32 %v503, 2147483648
  %v505 = vmul.f32 %v504, 1.442695
  %v506 = vpow.pop %v505
  %v507 = vadd.f32 %v506, 1.0
  %v508 = vrcp.pop %v507
  %v509 = vmul.f32 %v507, %v508
  %v510 = vsub.f32 1.0, %v509
  %v511 = vmul.f32 %v508, %v510
  %v512 = vadd.f32 %v508, %v511
  %vm513 = vweird.f32 %v507
  %vm514 = vweird.f32 %v508
  %vm515 = vmor %vm513, %vm514
  %v516 = vsel %vm515, %v508, %v512
  %v517 = vand.u32 2147483647, %v507
  %vm518 = vcmp.eq.f32.partialorder %v517, 8.507059e+37
  %v519 = vand.u32 %v507, 2147483648
  %v520 = vor.u32 1.1754944e-38, %v519
  %v521 = vsel %vm518, %v520, %v516
  %v522 = vmul.f32 1.0, %v521
  %v523 = vld [vmem:[%s3] sm:$0x1]
  %v525 = vperm.slane %v523, 0
  %v527 = vadd.f32 %v476, %v525
  %v528 = vmul.f32 %v502, %v527
  %v529 = vadd.f32 %v482, %v528
  %v530 = vtanh.pop %v529
  %v531 = vsub.f32 %v277, %v530
  %v532 = vmul.f32 %v522, %v531
  %v533 = vadd.f32 %v530, %v532
  %s534 = scalar_lea.vmem %s4, 8
  %535 = vst [vmem:[%s534] sm:$0xff] %v533
  %v536 = vpack.c.bf16 %v533, %v533
  %v537 = vld [vmem:[%s2] sm:$0xff]
  %v538 = vld [vmem:[%s2 + $0x8] sm:$0xf]
  %v539 = vld [vmem:[%s2 + $0xc] sm:$0xff]
  %v540 = vld [vmem:[%s2 + $0x14] sm:$0xf]
  %v541 = vld [vmem:[%s2 + $0x18] sm:$0xff]
  %v542 = vld [vmem:[%s2 + $0x20] sm:$0xf]
  %v543 = vld [vmem:[%s2 + $0x24] sm:$0xff]
  %v544 = vld [vmem:[%s2 + $0x2c] sm:$0xf]
  %v545 = vld [vmem:[%s2 + $0x30] sm:$0xff]
  %v546 = vld [vmem:[%s2 + $0x38] sm:$0xf]
  %v547 = vld [vmem:[%s2 + $0x3c] sm:$0xff]
  %v548 = vld [vmem:[%s2 + $0x44] sm:$0xf]
  %v549 = vld [vmem:[%s2 + $0x48] sm:$0xff]
  %v550 = vld [vmem:[%s2 + $0x50] sm:$0xf]
  %v551 = vld [vmem:[%s2 + $0x54] sm:$0xff]
  %v552 = vld [vmem:[%s2 + $0x5c] sm:$0xf]
  %v553 = vld [vmem:[%s2 + $0x60] sm:$0xff]
  %v554 = vld [vmem:[%s2 + $0x68] sm:$0xf]
  %v555 = vld [vmem:[%s2 + $0x6c] sm:$0xff]
  %v556 = vld [vmem:[%s2 + $0x74] sm:$0xf]
  %v557 = vld [vmem:[%s2 + $0x78] sm:$0xff]
  %v558 = vld [vmem:[%s2 + $0x80] sm:$0xf]
  %v559 = vld [vmem:[%s2 + $0x84] sm:$0xff]
  %v560 = vld [vmem:[%s2 + $0x8c] sm:$0xf]
  %v561 = vld [vmem:[%s2 + $0x90] sm:$0xff]
  %v562 = vld [vmem:[%s2 + $0x98] sm:$0xf]
  %v563 = vld [vmem:[%s2 + $0x9c] sm:$0xff]
  %v564 = vld [vmem:[%s2 + $0xa4] sm:$0xf]
  %v565 = vld [vmem:[%s2 + $0xa8] sm:$0xff]
  %v566 = vld [vmem:[%s2 + $0xb0] sm:$0xf]
  %v567 = vld [vmem:[%s2 + $0xb4] sm:$0xff]
  %v568 = vld [vmem:[%s2 + $0xbc] sm:$0xf]
  %v601 = vunpack.c.l.b16 %v537
  %v602 = vunpack.c.h.b16 %v537
  %v603 = vunpack.c.l.b16 %v538
  %v604 = vunpack.c.l.b16 %v539
  %v605 = vunpack.c.h.b16 %v539
  %v606 = vunpack.c.l.b16 %v540
  %v607 = vunpack.c.l.b16 %v541
  %v608 = vunpack.c.h.b16 %v541
  %v609 = vunpack.c.l.b16 %v542
  %v610 = vunpack.c.l.b16 %v543
  %v611 = vunpack.c.h.b16 %v543
  %v612 = vunpack.c.l.b16 %v544
  %v613 = vunpack.c.l.b16 %v545
  %v614 = vunpack.c.h.b16 %v545
  %v615 = vunpack.c.l.b16 %v546
  %v616 = vunpack.c.l.b16 %v547
  %v617 = vunpack.c.h.b16 %v547
  %v618 = vunpack.c.l.b16 %v548
  %v619 = vunpack.c.l.b16 %v549
  %v620 = vunpack.c.h.b16 %v549
  %v621 = vunpack.c.l.b16 %v550
  %v622 = vunpack.c.l.b16 %v551
  %v623 = vunpack.c.h.b16 %v551
  %v624 = vunpack.c.l.b16 %v552
  %v625 = vunpack.c.l.b16 %v553
  %v626 = vunpack.c.h.b16 %v553
  %v627 = vunpack.c.l.b16 %v554
  %v628 = vunpack.c.l.b16 %v555
  %v629 = vunpack.c.h.b16 %v555
  %v630 = vunpack.c.l.b16 %v556
  %v631 = vunpack.c.l.b16 %v557
  %v632 = vunpack.c.h.b16 %v557
  %v633 = vunpack.c.l.b16 %v558
  %v634 = vunpack.c.l.b16 %v559
  %v635 = vunpack.c.h.b16 %v559
  %v636 = vunpack.c.l.b16 %v560
  %v637 = vunpack.c.l.b16 %v561
  %v638 = vunpack.c.h.b16 %v561
  %v639 = vunpack.c.l.b16 %v562
  %v640 = vunpack.c.l.b16 %v563
  %v641 = vunpack.c.h.b16 %v563
  %v642 = vunpack.c.l.b16 %v564
  %v643 = vunpack.c.l.b16 %v565
  %v644 = vunpack.c.h.b16 %v565
  %v645 = vunpack.c.l.b16 %v566
  %v646 = vunpack.c.l.b16 %v567
  %v647 = vunpack.c.h.b16 %v567
  %v648 = vunpack.c.l.b16 %v568
  %v649 = vpack.c.b16 %v604, %v601
  %v650 = vpack.c.b16 %v605, %v602
  %v651 = vpack.c.b16 %v606, %v603
  %v652 = vpack.c.b16 %v610, %v607
  %v653 = vpack.c.b16 %v611, %v608
  %v654 = vpack.c.b16 %v612, %v609
  %v655 = vpack.c.b16 %v616, %v613
  %v656 = vpack.c.b16 %v617, %v614
  %v657 = vpack.c.b16 %v618, %v615
  %v658 = vpack.c.b16 %v622, %v619
  %v659 = vpack.c.b16 %v623, %v620
  %v660 = vpack.c.b16 %v624, %v621
  %v661 = vpack.c.b16 %v628, %v625
  %v662 = vpack.c.b16 %v629, %v626
  %v663 = vpack.c.b16 %v630, %v627
  %v664 = vpack.c.b16 %v634, %v631
  %v665 = vpack.c.b16 %v635, %v632
  %v666 = vpack.c.b16 %v636, %v633
  %v667 = vpack.c.b16 %v640, %v637
  %v668 = vpack.c.b16 %v641, %v638
  %v669 = vpack.c.b16 %v642, %v639
  %v670 = vpack.c.b16 %v646, %v643
  %v671 = vpack.c.b16 %v647, %v644
  %v672 = vpack.c.b16 %v648, %v645
  %697 = vmatpush.bf16.msra.mxu0 %v670
  %698 = vmatpush.bf16.msra.mxu0 %v667
  %699 = vmatpush.bf16.msra.mxu0 %v664
  %700 = vmatpush.bf16.msra.mxu0 %v661
  %701 = vmatpush.bf16.msra.mxu0 %v658
  %702 = vmatpush.bf16.msra.mxu0 %v655
  %703 = vmatpush.bf16.msra.mxu0 %v652
  %704 = vmatpush.bf16.msra.mxu0 %v649
  %705 = vmatmul.bf16.gmra.mxu0 %v536
  %v706 = vpop.f32.mrf.mxu0
  %v707 = vadd.f32 0.0, %v706
  %v708 = vpop.f32.mrf.mxu0
  %709 = vdwg.mxu0
  %710 = vmatpush.bf16.msra.mxu0 %v671
  %711 = vmatpush.bf16.msra.mxu0 %v668
  %712 = vmatpush.bf16.msra.mxu0 %v665
  %713 = vmatpush.bf16.msra.mxu0 %v662
  %714 = vmatpush.bf16.msra.mxu0 %v659
  %715 = vmatpush.bf16.msra.mxu0 %v656
  %716 = vmatpush.bf16.msra.mxu0 %v653
  %717 = vmatpush.bf16.msra.mxu0 %v650
  %718 = vmatmul.bf16.gmra.mxu0 %v536
  %v719 = vpop.f32.mrf.mxu0
  %v720 = vadd.f32 0.0, %v719
  %v721 = vpop.f32.mrf.mxu0
  %722 = vdwg.mxu0
  %723 = vmatpush.bf16.msra.mxu0 %v672
  %724 = vmatpush.bf16.msra.mxu0 %v669
  %725 = vmatpush.bf16.msra.mxu0 %v666
  %726 = vmatpush.bf16.msra.mxu0 %v663
  %727 = vmatpush.bf16.msra.mxu0 %v660
  %728 = vmatpush.bf16.msra.mxu0 %v657
  %729 = vmatpush.bf16.msra.mxu0 %v654
  %730 = vmatpush.bf16.msra.mxu0 %v651
  %731 = vmatmul.bf16.gmra.mxu0 %v536
  %v732 = vpop.f32.mrf.mxu0
  %v733 = vadd.f32 0.0, %v732
  %v734 = vpop.f32.mrf.mxu0
  %735 = vdwg.mxu0
  %s736 = scalar_lea.vmem %s0, 48
  %v737 = vld [vmem:[%s736] sm:$0xff]
  %v738 = vld [vmem:[%s736 + $0x8] sm:$0xff]
  %v739 = vld [vmem:[%s736 + $0x10] sm:$0xff]
  %v740 = vadd.f32 %v737, %v707
  %v741 = vxor.u32 %v740, 2147483648
  %v742 = vmul.f32 %v741, 1.442695
  %v743 = vpow.pop %v742
  %v744 = vadd.f32 %v743, 1.0
  %v745 = vrcp.pop %v744
  %v746 = vmul.f32 %v744, %v745
  %v747 = vsub.f32 1.0, %v746
  %v748 = vmul.f32 %v745, %v747
  %v749 = vadd.f32 %v745, %v748
  %vm750 = vweird.f32 %v744
  %vm751 = vweird.f32 %v745
  %vm752 = vmor %vm750, %vm751
  %v753 = vsel %vm752, %v745, %v749
  %v754 = vand.u32 2147483647, %v744
  %vm755 = vcmp.eq.f32.partialorder %v754, 8.507059e+37
  %v756 = vand.u32 %v744, 2147483648
  %v757 = vor.u32 1.1754944e-38, %v756
  %v758 = vsel %vm755, %v757, %v753
  %v759 = vmul.f32 1.0, %v758
  %v760 = vadd.f32 %v738, %v720
  %v761 = vxor.u32 %v760, 2147483648
  %v762 = vmul.f32 %v761, 1.442695
  %v763 = vpow.pop %v762
  %v764 = vadd.f32 %v763, 1.0
  %v765 = vrcp.pop %v764
  %v766 = vmul.f32 %v764, %v765
  %v767 = vsub.f32 1.0, %v766
  %v768 = vmul.f32 %v765, %v767
  %v769 = vadd.f32 %v765, %v768
  %vm770 = vweird.f32 %v764
  %vm771 = vweird.f32 %v765
  %vm772 = vmor %vm770, %vm771
  %v773 = vsel %vm772, %v765, %v769
  %v774 = vand.u32 2147483647, %v764
  %vm775 = vcmp.eq.f32.partialorder %v774, 8.507059e+37
  %v776 = vand.u32 %v764, 2147483648
  %v777 = vor.u32 1.1754944e-38, %v776
  %v778 = vsel %vm775, %v777, %v773
  %v779 = vmul.f32 1.0, %v778
  %v780 = vld [vmem:[%s3] sm:$0x1]
  %v782 = vperm.slane %v780, 0
  %v784 = vadd.f32 %v733, %v782
  %v785 = vmul.f32 %v759, %v784
  %v786 = vadd.f32 %v739, %v785
  %v787 = vtanh.pop %v786
  %v788 = vsub.f32 %v533, %v787
  %v789 = vmul.f32 %v779, %v788
  %v790 = vadd.f32 %v787, %v789
  %s791 = scalar_lea.vmem %s4, 16
  %792 = vst [vmem:[%s791] sm:$0xff] %v790
  %v793 = vpack.c.bf16 %v790, %v790
  %v794 = vld [vmem:[%s2] sm:$0xff]
  %v795 = vld [vmem:[%s2 + $0x8] sm:$0xf]
  %v796 = vld [vmem:[%s2 + $0xc] sm:$0xff]
  %v797 = vld [vmem:[%s2 + $0x14] sm:$0xf]
  %v798 = vld [vmem:[%s2 + $0x18] sm:$0xff]
  %v799 = vld [vmem:[%s2 + $0x20] sm:$0xf]
  %v800 = vld [vmem:[%s2 + $0x24] sm:$0xff]
  %v801 = vld [vmem:[%s2 + $0x2c] sm:$0xf]
  %v802 = vld [vmem:[%s2 + $0x30] sm:$0xff]
  %v803 = vld [vmem:[%s2 + $0x38] sm:$0xf]
  %v804 = vld [vmem:[%s2 + $0x3c] sm:$0xff]
  %v805 = vld [vmem:[%s2 + $0x44] sm:$0xf]
  %v806 = vld [vmem:[%s2 + $0x48] sm:$0xff]
  %v807 = vld [vmem:[%s2 + $0x50] sm:$0xf]
  %v808 = vld [vmem:[%s2 + $0x54] sm:$0xff]
  %v809 = vld [vmem:[%s2 + $0x5c] sm:$0xf]
  %v810 = vld [vmem:[%s2 + $0x60] sm:$0xff]
  %v811 = vld [vmem:[%s2 + $0x68] sm:$0xf]
  %v812 = vld [vmem:[%s2 + $0x6c] sm:$0xff]
  %v813 = vld [vmem:[%s2 + $0x74] sm:$0xf]
  %v814 = vld [vmem:[%s2 + $0x78] sm:$0xff]
  %v815 = vld [vmem:[%s2 + $0x80] sm:$0xf]
  %v816 = vld [vmem:[%s2 + $0x84] sm:$0xff]
  %v817 = vld [vmem:[%s2 + $0x8c] sm:$0xf]
  %v818 = vld [vmem:[%s2 + $0x90] sm:$0xff]
  %v819 = vld [vmem:[%s2 + $0x98] sm:$0xf]
  %v820 = vld [vmem:[%s2 + $0x9c] sm:$0xff]
  %v821 = vld [vmem:[%s2 + $0xa4] sm:$0xf]
  %v822 = vld [vmem:[%s2 + $0xa8] sm:$0xff]
  %v823 = vld [vmem:[%s2 + $0xb0] sm:$0xf]
  %v824 = vld [vmem:[%s2 + $0xb4] sm:$0xff]
  %v825 = vld [vmem:[%s2 + $0xbc] sm:$0xf]
  %v858 = vunpack.c.l.b16 %v794
  %v859 = vunpack.c.h.b16 %v794
  %v860 = vunpack.c.l.b16 %v795
  %v861 = vunpack.c.l.b16 %v796
  %v862 = vunpack.c.h.b16 %v796
  %v863 = vunpack.c.l.b16 %v797
  %v864 = vunpack.c.l.b16 %v798
  %v865 = vunpack.c.h.b16 %v798
  %v866 = vunpack.c.l.b16 %v799
  %v867 = vunpack.c.l.b16 %v800
  %v868 = vunpack.c.h.b16 %v800
  %v869 = vunpack.c.l.b16 %v801
  %v870 = vunpack.c.l.b16 %v802
  %v871 = vunpack.c.h.b16 %v802
  %v872 = vunpack.c.l.b16 %v803
  %v873 = vunpack.c.l.b16 %v804
  %v874 = vunpack.c.h.b16 %v804
  %v875 = vunpack.c.l.b16 %v805
  %v876 = vunpack.c.l.b16 %v806
  %v877 = vunpack.c.h.b16 %v806
  %v878 = vunpack.c.l.b16 %v807
  %v879 = vunpack.c.l.b16 %v808
  %v880 = vunpack.c.h.b16 %v808
  %v881 = vunpack.c.l.b16 %v809
  %v882 = vunpack.c.l.b16 %v810
  %v883 = vunpack.c.h.b16 %v810
  %v884 = vunpack.c.l.b16 %v811
  %v885 = vunpack.c.l.b16 %v812
  %v886 = vunpack.c.h.b16 %v812
  %v887 = vunpack.c.l.b16 %v813
  %v888 = vunpack.c.l.b16 %v814
  %v889 = vunpack.c.h.b16 %v814
  %v890 = vunpack.c.l.b16 %v815
  %v891 = vunpack.c.l.b16 %v816
  %v892 = vunpack.c.h.b16 %v816
  %v893 = vunpack.c.l.b16 %v817
  %v894 = vunpack.c.l.b16 %v818
  %v895 = vunpack.c.h.b16 %v818
  %v896 = vunpack.c.l.b16 %v819
  %v897 = vunpack.c.l.b16 %v820
  %v898 = vunpack.c.h.b16 %v820
  %v899 = vunpack.c.l.b16 %v821
  %v900 = vunpack.c.l.b16 %v822
  %v901 = vunpack.c.h.b16 %v822
  %v902 = vunpack.c.l.b16 %v823
  %v903 = vunpack.c.l.b16 %v824
  %v904 = vunpack.c.h.b16 %v824
  %v905 = vunpack.c.l.b16 %v825
  %v906 = vpack.c.b16 %v861, %v858
  %v907 = vpack.c.b16 %v862, %v859
  %v908 = vpack.c.b16 %v863, %v860
  %v909 = vpack.c.b16 %v867, %v864
  %v910 = vpack.c.b16 %v868, %v865
  %v911 = vpack.c.b16 %v869, %v866
  %v912 = vpack.c.b16 %v873, %v870
  %v913 = vpack.c.b16 %v874, %v871
  %v914 = vpack.c.b16 %v875, %v872
  %v915 = vpack.c.b16 %v879, %v876
  %v916 = vpack.c.b16 %v880, %v877
  %v917 = vpack.c.b16 %v881, %v878
  %v918 = vpack.c.b16 %v885, %v882
  %v919 = vpack.c.b16 %v886, %v883
  %v920 = vpack.c.b16 %v887, %v884
  %v921 = vpack.c.b16 %v891, %v888
  %v922 = vpack.c.b16 %v892, %v889
  %v923 = vpack.c.b16 %v893, %v890
  %v924 = vpack.c.b16 %v897, %v894
  %v925 = vpack.c.b16 %v898, %v895
  %v926 = vpack.c.b16 %v899, %v896
  %v927 = vpack.c.b16 %v903, %v900
  %v928 = vpack.c.b16 %v904, %v901
  %v929 = vpack.c.b16 %v905, %v902
  %954 = vmatpush.bf16.msra.mxu0 %v927
  %955 = vmatpush.bf16.msra.mxu0 %v924
  %956 = vmatpush.bf16.msra.mxu0 %v921
  %957 = vmatpush.bf16.msra.mxu0 %v918
  %958 = vmatpush.bf16.msra.mxu0 %v915
  %959 = vmatpush.bf16.msra.mxu0 %v912
  %960 = vmatpush.bf16.msra.mxu0 %v909
  %961 = vmatpush.bf16.msra.mxu0 %v906
  %962 = vmatmul.bf16.gmra.mxu0 %v793
  %v963 = vpop.f32.mrf.mxu0
  %v964 = vadd.f32 0.0, %v963
  %v965 = vpop.f32.mrf.mxu0
  %966 = vdwg.mxu0
  %967 = vmatpush.bf16.msra.mxu0 %v928
  %968 = vmatpush.bf16.msra.mxu0 %v925
  %969 = vmatpush.bf16.msra.mxu0 %v922
  %970 = vmatpush.bf16.msra.mxu0 %v919
  %971 = vmatpush.bf16.msra.mxu0 %v916
  %972 = vmatpush.bf16.msra.mxu0 %v913
  %973 = vmatpush.bf16.msra.mxu0 %v910
  %974 = vmatpush.bf16.msra.mxu0 %v907
  %975 = vmatmul.bf16.gmra.mxu0 %v793
  %v976 = vpop.f32.mrf.mxu0
  %v977 = vadd.f32 0.0, %v976
  %v978 = vpop.f32.mrf.mxu0
  %979 = vdwg.mxu0
  %980 = vmatpush.bf16.msra.mxu0 %v929
  %981 = vmatpush.bf16.msra.mxu0 %v926
  %982 = vmatpush.bf16.msra.mxu0 %v923
  %983 = vmatpush.bf16.msra.mxu0 %v920
  %984 = vmatpush.bf16.msra.mxu0 %v917
  %985 = vmatpush.bf16.msra.mxu0 %v914
  %986 = vmatpush.bf16.msra.mxu0 %v911
  %987 = vmatpush.bf16.msra.mxu0 %v908
  %988 = vmatmul.bf16.gmra.mxu0 %v793
  %v989 = vpop.f32.mrf.mxu0
  %v990 = vadd.f32 0.0, %v989
  %v991 = vpop.f32.mrf.mxu0
  %992 = vdwg.mxu0
  %s993 = scalar_lea.vmem %s0, 72
  %v994 = vld [vmem:[%s993] sm:$0xff]
  %v995 = vld [vmem:[%s993 + $0x8] sm:$0xff]
  %v996 = vld [vmem:[%s993 + $0x10] sm:$0xff]
  %v997 = vadd.f32 %v994, %v964
  %v998 = vxor.u32 %v997, 2147483648
  %v999 = vmul.f32 %v998, 1.442695
  %v1000 = vpow.pop %v999
  %v1001 = vadd.f32 %v1000, 1.0
  %v1002 = vrcp.pop %v1001
  %v1003 = vmul.f32 %v1001, %v1002
  %v1004 = vsub.f32 1.0, %v1003
  %v1005 = vmul.f32 %v1002, %v1004
  %v1006 = vadd.f32 %v1002, %v1005
  %vm1007 = vweird.f32 %v1001
  %vm1008 = vweird.f32 %v1002
  %vm1009 = vmor %vm1007, %vm1008
  %v1010 = vsel %vm1009, %v1002, %v1006
  %v1011 = vand.u32 2147483647, %v1001
  %vm1012 = vcmp.eq.f32.partialorder %v1011, 8.507059e+37
  %v1013 = vand.u32 %v1001, 2147483648
  %v1014 = vor.u32 1.1754944e-38, %v1013
  %v1015 = vsel %vm1012, %v1014, %v1010
  %v1016 = vmul.f32 1.0, %v1015
  %v1017 = vadd.f32 %v995, %v977
  %v1018 = vxor.u32 %v1017, 2147483648
  %v1019 = vmul.f32 %v1018, 1.442695
  %v1020 = vpow.pop %v1019
  %v1021 = vadd.f32 %v1020, 1.0
  %v1022 = vrcp.pop %v1021
  %v1023 = vmul.f32 %v1021, %v1022
  %v1024 = vsub.f32 1.0, %v1023
  %v1025 = vmul.f32 %v1022, %v1024
  %v1026 = vadd.f32 %v1022, %v1025
  %vm1027 = vweird.f32 %v1021
  %vm1028 = vweird.f32 %v1022
  %vm1029 = vmor %vm1027, %vm1028
  %v1030 = vsel %vm1029, %v1022, %v1026
  %v1031 = vand.u32 2147483647, %v1021
  %vm1032 = vcmp.eq.f32.partialorder %v1031, 8.507059e+37
  %v1033 = vand.u32 %v1021, 2147483648
  %v1034 = vor.u32 1.1754944e-38, %v1033
  %v1035 = vsel %vm1032, %v1034, %v1030
  %v1036 = vmul.f32 1.0, %v1035
  %v1037 = vld [vmem:[%s3] sm:$0x1]
  %v1039 = vperm.slane %v1037, 0
  %v1041 = vadd.f32 %v990, %v1039
  %v1042 = vmul.f32 %v1016, %v1041
  %v1043 = vadd.f32 %v996, %v1042
  %v1044 = vtanh.pop %v1043
  %v1045 = vsub.f32 %v790, %v1044
  %v1046 = vmul.f32 %v1036, %v1045
  %v1047 = vadd.f32 %v1044, %v1046
  %s1048 = scalar_lea.vmem %s4, 24
  %1049 = vst [vmem:[%s1048] sm:$0xff] %v1047
  %v1050 = vpack.c.bf16 %v1047, %v1047
  %v1051 = vld [vmem:[%s2] sm:$0xff]
  %v1052 = vld [vmem:[%s2 + $0x8] sm:$0xf]
  %v1053 = vld [vmem:[%s2 + $0xc] sm:$0xff]
  %v1054 = vld [vmem:[%s2 + $0x14] sm:$0xf]
  %v1055 = vld [vmem:[%s2 + $0x18] sm:$0xff]
  %v1056 = vld [vmem:[%s2 + $0x20] sm:$0xf]
  %v1057 = vld [vmem:[%s2 + $0x24] sm:$0xff]
  %v1058 = vld [vmem:[%s2 + $0x2c] sm:$0xf]
  %v1059 = vld [vmem:[%s2 + $0x30] sm:$0xff]
  %v1060 = vld [vmem:[%s2 + $0x38] sm:$0xf]
  %v1061 = vld [vmem:[%s2 + $0x3c] sm:$0xff]
  %v1062 = vld [vmem:[%s2 + $0x44] sm:$0xf]
  %v1063 = vld [vmem:[%s2 + $0x48] sm:$0xff]
  %v1064 = vld [vmem:[%s2 + $0x50] sm:$0xf]
  %v1065 = vld [vmem:[%s2 + $0x54] sm:$0xff]
  %v1066 = vld [vmem:[%s2 + $0x5c] sm:$0xf]
  %v1067 = vld [vmem:[%s2 + $0x60] sm:$0xff]
  %v1068 = vld [vmem:[%s2 + $0x68] sm:$0xf]
  %v1069 = vld [vmem:[%s2 + $0x6c] sm:$0xff]
  %v1070 = vld [vmem:[%s2 + $0x74] sm:$0xf]
  %v1071 = vld [vmem:[%s2 + $0x78] sm:$0xff]
  %v1072 = vld [vmem:[%s2 + $0x80] sm:$0xf]
  %v1073 = vld [vmem:[%s2 + $0x84] sm:$0xff]
  %v1074 = vld [vmem:[%s2 + $0x8c] sm:$0xf]
  %v1075 = vld [vmem:[%s2 + $0x90] sm:$0xff]
  %v1076 = vld [vmem:[%s2 + $0x98] sm:$0xf]
  %v1077 = vld [vmem:[%s2 + $0x9c] sm:$0xff]
  %v1078 = vld [vmem:[%s2 + $0xa4] sm:$0xf]
  %v1079 = vld [vmem:[%s2 + $0xa8] sm:$0xff]
  %v1080 = vld [vmem:[%s2 + $0xb0] sm:$0xf]
  %v1081 = vld [vmem:[%s2 + $0xb4] sm:$0xff]
  %v1082 = vld [vmem:[%s2 + $0xbc] sm:$0xf]
  %v1115 = vunpack.c.l.b16 %v1051
  %v1116 = vunpack.c.h.b16 %v1051
  %v1117 = vunpack.c.l.b16 %v1052
  %v1118 = vunpack.c.l.b16 %v1053
  %v1119 = vunpack.c.h.b16 %v1053
  %v1120 = vunpack.c.l.b16 %v1054
  %v1121 = vunpack.c.l.b16 %v1055
  %v1122 = vunpack.c.h.b16 %v1055
  %v1123 = vunpack.c.l.b16 %v1056
  %v1124 = vunpack.c.l.b16 %v1057
  %v1125 = vunpack.c.h.b16 %v1057
  %v1126 = vunpack.c.l.b16 %v1058
  %v1127 = vunpack.c.l.b16 %v1059
  %v1128 = vunpack.c.h.b16 %v1059
  %v1129 = vunpack.c.l.b16 %v1060
  %v1130 = vunpack.c.l.b16 %v1061
  %v1131 = vunpack.c.h.b16 %v1061
  %v1132 = vunpack.c.l.b16 %v1062
  %v1133 = vunpack.c.l.b16 %v1063
  %v1134 = vunpack.c.h.b16 %v1063
  %v1135 = vunpack.c.l.b16 %v1064
  %v1136 = vunpack.c.l.b16 %v1065
  %v1137 = vunpack.c.h.b16 %v1065
  %v1138 = vunpack.c.l.b16 %v1066
  %v1139 = vunpack.c.l.b16 %v1067
  %v1140 = vunpack.c.h.b16 %v1067
  %v1141 = vunpack.c.l.b16 %v1068
  %v1142 = vunpack.c.l.b16 %v1069
  %v1143 = vunpack.c.h.b16 %v1069
  %v1144 = vunpack.c.l.b16 %v1070
  %v1145 = vunpack.c.l.b16 %v1071
  %v1146 = vunpack.c.h.b16 %v1071
  %v1147 = vunpack.c.l.b16 %v1072
  %v1148 = vunpack.c.l.b16 %v1073
  %v1149 = vunpack.c.h.b16 %v1073
  %v1150 = vunpack.c.l.b16 %v1074
  %v1151 = vunpack.c.l.b16 %v1075
  %v1152 = vunpack.c.h.b16 %v1075
  %v1153 = vunpack.c.l.b16 %v1076
  %v1154 = vunpack.c.l.b16 %v1077
  %v1155 = vunpack.c.h.b16 %v1077
  %v1156 = vunpack.c.l.b16 %v1078
  %v1157 = vunpack.c.l.b16 %v1079
  %v1158 = vunpack.c.h.b16 %v1079
  %v1159 = vunpack.c.l.b16 %v1080
  %v1160 = vunpack.c.l.b16 %v1081
  %v1161 = vunpack.c.h.b16 %v1081
  %v1162 = vunpack.c.l.b16 %v1082
  %v1163 = vpack.c.b16 %v1118, %v1115
  %v1164 = vpack.c.b16 %v1119, %v1116
  %v1165 = vpack.c.b16 %v1120, %v1117
  %v1166 = vpack.c.b16 %v1124, %v1121
  %v1167 = vpack.c.b16 %v1125, %v1122
  %v1168 = vpack.c.b16 %v1126, %v1123
  %v1169 = vpack.c.b16 %v1130, %v1127
  %v1170 = vpack.c.b16 %v1131, %v1128
  %v1171 = vpack.c.b16 %v1132, %v1129
  %v1172 = vpack.c.b16 %v1136, %v1133
  %v1173 = vpack.c.b16 %v1137, %v1134
  %v1174 = vpack.c.b16 %v1138, %v1135
  %v1175 = vpack.c.b16 %v1142, %v1139
  %v1176 = vpack.c.b16 %v1143, %v1140
  %v1177 = vpack.c.b16 %v1144, %v1141
  %v1178 = vpack.c.b16 %v1148, %v1145
  %v1179 = vpack.c.b16 %v1149, %v1146
  %v1180 = vpack.c.b16 %v1150, %v1147
  %v1181 = vpack.c.b16 %v1154, %v1151
  %v1182 = vpack.c.b16 %v1155, %v1152
  %v1183 = vpack.c.b16 %v1156, %v1153
  %v1184 = vpack.c.b16 %v1160, %v1157
  %v1185 = vpack.c.b16 %v1161, %v1158
  %v1186 = vpack.c.b16 %v1162, %v1159
  %1211 = vmatpush.bf16.msra.mxu0 %v1184
  %1212 = vmatpush.bf16.msra.mxu0 %v1181
  %1213 = vmatpush.bf16.msra.mxu0 %v1178
  %1214 = vmatpush.bf16.msra.mxu0 %v1175
  %1215 = vmatpush.bf16.msra.mxu0 %v1172
  %1216 = vmatpush.bf16.msra.mxu0 %v1169
  %1217 = vmatpush.bf16.msra.mxu0 %v1166
  %1218 = vmatpush.bf16.msra.mxu0 %v1163
  %1219 = vmatmul.bf16.gmra.mxu0 %v1050
  %v1220 = vpop.f32.mrf.mxu0
  %v1221 = vadd.f32 0.0, %v1220
  %v1222 = vpop.f32.mrf.mxu0
  %1223 = vdwg.mxu0
  %1224 = vmatpush.bf16.msra.mxu0 %v1185
  %1225 = vmatpush.bf16.msra.mxu0 %v1182
  %1226 = vmatpush.bf16.msra.mxu0 %v1179
  %1227 = vmatpush.bf16.msra.mxu0 %v1176
  %1228 = vmatpush.bf16.msra.mxu0 %v1173
  %1229 = vmatpush.bf16.msra.mxu0 %v1170
  %1230 = vmatpush.bf16.msra.mxu0 %v1167
  %1231 = vmatpush.bf16.msra.mxu0 %v1164
  %1232 = vmatmul.bf16.gmra.mxu0 %v1050
  %v1233 = vpop.f32.mrf.mxu0
  %v1234 = vadd.f32 0.0, %v1233
  %v1235 = vpop.f32.mrf.mxu0
  %1236 = vdwg.mxu0
  %1237 = vmatpush.bf16.msra.mxu0 %v1186
  %1238 = vmatpush.bf16.msra.mxu0 %v1183
  %1239 = vmatpush.bf16.msra.mxu0 %v1180
  %1240 = vmatpush.bf16.msra.mxu0 %v1177
  %1241 = vmatpush.bf16.msra.mxu0 %v1174
  %1242 = vmatpush.bf16.msra.mxu0 %v1171
  %1243 = vmatpush.bf16.msra.mxu0 %v1168
  %1244 = vmatpush.bf16.msra.mxu0 %v1165
  %1245 = vmatmul.bf16.gmra.mxu0 %v1050
  %v1246 = vpop.f32.mrf.mxu0
  %v1247 = vadd.f32 0.0, %v1246
  %v1248 = vpop.f32.mrf.mxu0
  %1249 = vdwg.mxu0
  %s1250 = scalar_lea.vmem %s0, 96
  %v1251 = vld [vmem:[%s1250] sm:$0xff]
  %v1252 = vld [vmem:[%s1250 + $0x8] sm:$0xff]
  %v1253 = vld [vmem:[%s1250 + $0x10] sm:$0xff]
  %v1254 = vadd.f32 %v1251, %v1221
  %v1255 = vxor.u32 %v1254, 2147483648
  %v1256 = vmul.f32 %v1255, 1.442695
  %v1257 = vpow.pop %v1256
  %v1258 = vadd.f32 %v1257, 1.0
  %v1259 = vrcp.pop %v1258
  %v1260 = vmul.f32 %v1258, %v1259
  %v1261 = vsub.f32 1.0, %v1260
  %v1262 = vmul.f32 %v1259, %v1261
  %v1263 = vadd.f32 %v1259, %v1262
  %vm1264 = vweird.f32 %v1258
  %vm1265 = vweird.f32 %v1259
  %vm1266 = vmor %vm1264, %vm1265
  %v1267 = vsel %vm1266, %v1259, %v1263
  %v1268 = vand.u32 2147483647, %v1258
  %vm1269 = vcmp.eq.f32.partialorder %v1268, 8.507059e+37
  %v1270 = vand.u32 %v1258, 2147483648
  %v1271 = vor.u32 1.1754944e-38, %v1270
  %v1272 = vsel %vm1269, %v1271, %v1267
  %v1273 = vmul.f32 1.0, %v1272
  %v1274 = vadd.f32 %v1252, %v1234
  %v1275 = vxor.u32 %v1274, 2147483648
  %v1276 = vmul.f32 %v1275, 1.442695
  %v1277 = vpow.pop %v1276
  %v1278 = vadd.f32 %v1277, 1.0
  %v1279 = vrcp.pop %v1278
  %v1280 = vmul.f32 %v1278, %v1279
  %v1281 = vsub.f32 1.0, %v1280
  %v1282 = vmul.f32 %v1279, %v1281
  %v1283 = vadd.f32 %v1279, %v1282
  %vm1284 = vweird.f32 %v1278
  %vm1285 = vweird.f32 %v1279
  %vm1286 = vmor %vm1284, %vm1285
  %v1287 = vsel %vm1286, %v1279, %v1283
  %v1288 = vand.u32 2147483647, %v1278
  %vm1289 = vcmp.eq.f32.partialorder %v1288, 8.507059e+37
  %v1290 = vand.u32 %v1278, 2147483648
  %v1291 = vor.u32 1.1754944e-38, %v1290
  %v1292 = vsel %vm1289, %v1291, %v1287
  %v1293 = vmul.f32 1.0, %v1292
  %v1294 = vld [vmem:[%s3] sm:$0x1]
  %v1296 = vperm.slane %v1294, 0
  %v1298 = vadd.f32 %v1247, %v1296
  %v1299 = vmul.f32 %v1273, %v1298
  %v1300 = vadd.f32 %v1253, %v1299
  %v1301 = vtanh.pop %v1300
  %v1302 = vsub.f32 %v1047, %v1301
  %v1303 = vmul.f32 %v1293, %v1302
  %v1304 = vadd.f32 %v1301, %v1303
  %s1305 = scalar_lea.vmem %s4, 32
  %1306 = vst [vmem:[%s1305] sm:$0xff] %v1304
  %v1307 = vpack.c.bf16 %v1304, %v1304
  %v1308 = vld [vmem:[%s2] sm:$0xff]
  %v1309 = vld [vmem:[%s2 + $0x8] sm:$0xf]
  %v1310 = vld [vmem:[%s2 + $0xc] sm:$0xff]
  %v1311 = vld [vmem:[%s2 + $0x14] sm:$0xf]
  %v1312 = vld [vmem:[%s2 + $0x18] sm:$0xff]
  %v1313 = vld [vmem:[%s2 + $0x20] sm:$0xf]
  %v1314 = vld [vmem:[%s2 + $0x24] sm:$0xff]
  %v1315 = vld [vmem:[%s2 + $0x2c] sm:$0xf]
  %v1316 = vld [vmem:[%s2 + $0x30] sm:$0xff]
  %v1317 = vld [vmem:[%s2 + $0x38] sm:$0xf]
  %v1318 = vld [vmem:[%s2 + $0x3c] sm:$0xff]
  %v1319 = vld [vmem:[%s2 + $0x44] sm:$0xf]
  %v1320 = vld [vmem:[%s2 + $0x48] sm:$0xff]
  %v1321 = vld [vmem:[%s2 + $0x50] sm:$0xf]
  %v1322 = vld [vmem:[%s2 + $0x54] sm:$0xff]
  %v1323 = vld [vmem:[%s2 + $0x5c] sm:$0xf]
  %v1324 = vld [vmem:[%s2 + $0x60] sm:$0xff]
  %v1325 = vld [vmem:[%s2 + $0x68] sm:$0xf]
  %v1326 = vld [vmem:[%s2 + $0x6c] sm:$0xff]
  %v1327 = vld [vmem:[%s2 + $0x74] sm:$0xf]
  %v1328 = vld [vmem:[%s2 + $0x78] sm:$0xff]
  %v1329 = vld [vmem:[%s2 + $0x80] sm:$0xf]
  %v1330 = vld [vmem:[%s2 + $0x84] sm:$0xff]
  %v1331 = vld [vmem:[%s2 + $0x8c] sm:$0xf]
  %v1332 = vld [vmem:[%s2 + $0x90] sm:$0xff]
  %v1333 = vld [vmem:[%s2 + $0x98] sm:$0xf]
  %v1334 = vld [vmem:[%s2 + $0x9c] sm:$0xff]
  %v1335 = vld [vmem:[%s2 + $0xa4] sm:$0xf]
  %v1336 = vld [vmem:[%s2 + $0xa8] sm:$0xff]
  %v1337 = vld [vmem:[%s2 + $0xb0] sm:$0xf]
  %v1338 = vld [vmem:[%s2 + $0xb4] sm:$0xff]
  %v1339 = vld [vmem:[%s2 + $0xbc] sm:$0xf]
  %v1372 = vunpack.c.l.b16 %v1308
  %v1373 = vunpack.c.h.b16 %v1308
  %v1374 = vunpack.c.l.b16 %v1309
  %v1375 = vunpack.c.l.b16 %v1310
  %v1376 = vunpack.c.h.b16 %v1310
  %v1377 = vunpack.c.l.b16 %v1311
  %v1378 = vunpack.c.l.b16 %v1312
  %v1379 = vunpack.c.h.b16 %v1312
  %v1380 = vunpack.c.l.b16 %v1313
  %v1381 = vunpack.c.l.b16 %v1314
  %v1382 = vunpack.c.h.b16 %v1314
  %v1383 = vunpack.c.l.b16 %v1315
  %v1384 = vunpack.c.l.b16 %v1316
  %v1385 = vunpack.c.h.b16 %v1316
  %v1386 = vunpack.c.l.b16 %v1317
  %v1387 = vunpack.c.l.b16 %v1318
  %v1388 = vunpack.c.h.b16 %v1318
  %v1389 = vunpack.c.l.b16 %v1319
  %v1390 = vunpack.c.l.b16 %v1320
  %v1391 = vunpack.c.h.b16 %v1320
  %v1392 = vunpack.c.l.b16 %v1321
  %v1393 = vunpack.c.l.b16 %v1322
  %v1394 = vunpack.c.h.b16 %v1322
  %v1395 = vunpack.c.l.b16 %v1323
  %v1396 = vunpack.c.l.b16 %v1324
  %v1397 = vunpack.c.h.b16 %v1324
  %v1398 = vunpack.c.l.b16 %v1325
  %v1399 = vunpack.c.l.b16 %v1326
  %v1400 = vunpack.c.h.b16 %v1326
  %v1401 = vunpack.c.l.b16 %v1327
  %v1402 = vunpack.c.l.b16 %v1328
  %v1403 = vunpack.c.h.b16 %v1328
  %v1404 = vunpack.c.l.b16 %v1329
  %v1405 = vunpack.c.l.b16 %v1330
  %v1406 = vunpack.c.h.b16 %v1330
  %v1407 = vunpack.c.l.b16 %v1331
  %v1408 = vunpack.c.l.b16 %v1332
  %v1409 = vunpack.c.h.b16 %v1332
  %v1410 = vunpack.c.l.b16 %v1333
  %v1411 = vunpack.c.l.b16 %v1334
  %v1412 = vunpack.c.h.b16 %v1334
  %v1413 = vunpack.c.l.b16 %v1335
  %v1414 = vunpack.c.l.b16 %v1336
  %v1415 = vunpack.c.h.b16 %v1336
  %v1416 = vunpack.c.l.b16 %v1337
  %v1417 = vunpack.c.l.b16 %v1338
  %v1418 = vunpack.c.h.b16 %v1338
  %v1419 = vunpack.c.l.b16 %v1339
  %v1420 = vpack.c.b16 %v1375, %v1372
  %v1421 = vpack.c.b16 %v1376, %v1373
  %v1422 = vpack.c.b16 %v1377, %v1374
  %v1423 = vpack.c.b16 %v1381, %v1378
  %v1424 = vpack.c.b16 %v1382, %v1379
  %v1425 = vpack.c.b16 %v1383, %v1380
  %v1426 = vpack.c.b16 %v1387, %v1384
  %v1427 = vpack.c.b16 %v1388, %v1385
  %v1428 = vpack.c.b16 %v1389, %v1386
  %v1429 = vpack.c.b16 %v1393, %v1390
  %v1430 = vpack.c.b16 %v1394, %v1391
  %v1431 = vpack.c.b16 %v1395, %v1392
  %v1432 = vpack.c.b16 %v1399, %v1396
  %v1433 = vpack.c.b16 %v1400, %v1397
  %v1434 = vpack.c.b16 %v1401, %v1398
  %v1435 = vpack.c.b16 %v1405, %v1402
  %v1436 = vpack.c.b16 %v1406, %v1403
  %v1437 = vpack.c.b16 %v1407, %v1404
  %v1438 = vpack.c.b16 %v1411, %v1408
  %v1439 = vpack.c.b16 %v1412, %v1409
  %v1440 = vpack.c.b16 %v1413, %v1410
  %v1441 = vpack.c.b16 %v1417, %v1414
  %v1442 = vpack.c.b16 %v1418, %v1415
  %v1443 = vpack.c.b16 %v1419, %v1416
  %1468 = vmatpush.bf16.msra.mxu0 %v1441
  %1469 = vmatpush.bf16.msra.mxu0 %v1438
  %1470 = vmatpush.bf16.msra.mxu0 %v1435
  %1471 = vmatpush.bf16.msra.mxu0 %v1432
  %1472 = vmatpush.bf16.msra.mxu0 %v1429
  %1473 = vmatpush.bf16.msra.mxu0 %v1426
  %1474 = vmatpush.bf16.msra.mxu0 %v1423
  %1475 = vmatpush.bf16.msra.mxu0 %v1420
  %1476 = vmatmul.bf16.gmra.mxu0 %v1307
  %v1477 = vpop.f32.mrf.mxu0
  %v1478 = vadd.f32 0.0, %v1477
  %v1479 = vpop.f32.mrf.mxu0
  %1480 = vdwg.mxu0
  %1481 = vmatpush.bf16.msra.mxu0 %v1442
  %1482 = vmatpush.bf16.msra.mxu0 %v1439
  %1483 = vmatpush.bf16.msra.mxu0 %v1436
  %1484 = vmatpush.bf16.msra.mxu0 %v1433
  %1485 = vmatpush.bf16.msra.mxu0 %v1430
  %1486 = vmatpush.bf16.msra.mxu0 %v1427
  %1487 = vmatpush.bf16.msra.mxu0 %v1424
  %1488 = vmatpush.bf16.msra.mxu0 %v1421
  %1489 = vmatmul.bf16.gmra.mxu0 %v1307
  %v1490 = vpop.f32.mrf.mxu0
  %v1491 = vadd.f32 0.0, %v1490
  %v1492 = vpop.f32.mrf.mxu0
  %1493 = vdwg.mxu0
  %1494 = vmatpush.bf16.msra.mxu0 %v1443
  %1495 = vmatpush.bf16.msra.mxu0 %v1440
  %1496 = vmatpush.bf16.msra.mxu0 %v1437
  %1497 = vmatpush.bf16.msra.mxu0 %v1434
  %1498 = vmatpush.bf16.msra.mxu0 %v1431
  %1499 = vmatpush.bf16.msra.mxu0 %v1428
  %1500 = vmatpush.bf16.msra.mxu0 %v1425
  %1501 = vmatpush.bf16.msra.mxu0 %v1422
  %1502 = vmatmul.bf16.gmra.mxu0 %v1307
  %v1503 = vpop.f32.mrf.mxu0
  %v1504 = vadd.f32 0.0, %v1503
  %v1505 = vpop.f32.mrf.mxu0
  %1506 = vdwg.mxu0
  %s1507 = scalar_lea.vmem %s0, 120
  %v1508 = vld [vmem:[%s1507] sm:$0xff]
  %v1509 = vld [vmem:[%s1507 + $0x8] sm:$0xff]
  %v1510 = vld [vmem:[%s1507 + $0x10] sm:$0xff]
  %v1511 = vadd.f32 %v1508, %v1478
  %v1512 = vxor.u32 %v1511, 2147483648
  %v1513 = vmul.f32 %v1512, 1.442695
  %v1514 = vpow.pop %v1513
  %v1515 = vadd.f32 %v1514, 1.0
  %v1516 = vrcp.pop %v1515
  %v1517 = vmul.f32 %v1515, %v1516
  %v1518 = vsub.f32 1.0, %v1517
  %v1519 = vmul.f32 %v1516, %v1518
  %v1520 = vadd.f32 %v1516, %v1519
  %vm1521 = vweird.f32 %v1515
  %vm1522 = vweird.f32 %v1516
  %vm1523 = vmor %vm1521, %vm1522
  %v1524 = vsel %vm1523, %v1516, %v1520
  %v1525 = vand.u32 2147483647, %v1515
  %vm1526 = vcmp.eq.f32.partialorder %v1525, 8.507059e+37
  %v1527 = vand.u32 %v1515, 2147483648
  %v1528 = vor.u32 1.1754944e-38, %v1527
  %v1529 = vsel %vm1526, %v1528, %v1524
  %v1530 = vmul.f32 1.0, %v1529
  %v1531 = vadd.f32 %v1509, %v1491
  %v1532 = vxor.u32 %v1531, 2147483648
  %v1533 = vmul.f32 %v1532, 1.442695
  %v1534 = vpow.pop %v1533
  %v1535 = vadd.f32 %v1534, 1.0
  %v1536 = vrcp.pop %v1535
  %v1537 = vmul.f32 %v1535, %v1536
  %v1538 = vsub.f32 1.0, %v1537
  %v1539 = vmul.f32 %v1536, %v1538
  %v1540 = vadd.f32 %v1536, %v1539
  %vm1541 = vweird.f32 %v1535
  %vm1542 = vweird.f32 %v1536
  %vm1543 = vmor %vm1541, %vm1542
  %v1544 = vsel %vm1543, %v1536, %v1540
  %v1545 = vand.u32 2147483647, %v1535
  %vm1546 = vcmp.eq.f32.partialorder %v1545, 8.507059e+37
  %v1547 = vand.u32 %v1535, 2147483648
  %v1548 = vor.u32 1.1754944e-38, %v1547
  %v1549 = vsel %vm1546, %v1548, %v1544
  %v1550 = vmul.f32 1.0, %v1549
  %v1551 = vld [vmem:[%s3] sm:$0x1]
  %v1553 = vperm.slane %v1551, 0
  %v1555 = vadd.f32 %v1504, %v1553
  %v1556 = vmul.f32 %v1530, %v1555
  %v1557 = vadd.f32 %v1510, %v1556
  %v1558 = vtanh.pop %v1557
  %v1559 = vsub.f32 %v1304, %v1558
  %v1560 = vmul.f32 %v1550, %v1559
  %v1561 = vadd.f32 %v1558, %v1560
  %s1562 = scalar_lea.vmem %s4, 40
  %1563 = vst [vmem:[%s1562] sm:$0xff] %v1561
  %v1564 = vpack.c.bf16 %v1561, %v1561
  %v1565 = vld [vmem:[%s2] sm:$0xff]
  %v1566 = vld [vmem:[%s2 + $0x8] sm:$0xf]
  %v1567 = vld [vmem:[%s2 + $0xc] sm:$0xff]
  %v1568 = vld [vmem:[%s2 + $0x14] sm:$0xf]
  %v1569 = vld [vmem:[%s2 + $0x18] sm:$0xff]
  %v1570 = vld [vmem:[%s2 + $0x20] sm:$0xf]
  %v1571 = vld [vmem:[%s2 + $0x24] sm:$0xff]
  %v1572 = vld [vmem:[%s2 + $0x2c] sm:$0xf]
  %v1573 = vld [vmem:[%s2 + $0x30] sm:$0xff]
  %v1574 = vld [vmem:[%s2 + $0x38] sm:$0xf]
  %v1575 = vld [vmem:[%s2 + $0x3c] sm:$0xff]
  %v1576 = vld [vmem:[%s2 + $0x44] sm:$0xf]
  %v1577 = vld [vmem:[%s2 + $0x48] sm:$0xff]
  %v1578 = vld [vmem:[%s2 + $0x50] sm:$0xf]
  %v1579 = vld [vmem:[%s2 + $0x54] sm:$0xff]
  %v1580 = vld [vmem:[%s2 + $0x5c] sm:$0xf]
  %v1581 = vld [vmem:[%s2 + $0x60] sm:$0xff]
  %v1582 = vld [vmem:[%s2 + $0x68] sm:$0xf]
  %v1583 = vld [vmem:[%s2 + $0x6c] sm:$0xff]
  %v1584 = vld [vmem:[%s2 + $0x74] sm:$0xf]
  %v1585 = vld [vmem:[%s2 + $0x78] sm:$0xff]
  %v1586 = vld [vmem:[%s2 + $0x80] sm:$0xf]
  %v1587 = vld [vmem:[%s2 + $0x84] sm:$0xff]
  %v1588 = vld [vmem:[%s2 + $0x8c] sm:$0xf]
  %v1589 = vld [vmem:[%s2 + $0x90] sm:$0xff]
  %v1590 = vld [vmem:[%s2 + $0x98] sm:$0xf]
  %v1591 = vld [vmem:[%s2 + $0x9c] sm:$0xff]
  %v1592 = vld [vmem:[%s2 + $0xa4] sm:$0xf]
  %v1593 = vld [vmem:[%s2 + $0xa8] sm:$0xff]
  %v1594 = vld [vmem:[%s2 + $0xb0] sm:$0xf]
  %v1595 = vld [vmem:[%s2 + $0xb4] sm:$0xff]
  %v1596 = vld [vmem:[%s2 + $0xbc] sm:$0xf]
  %v1629 = vunpack.c.l.b16 %v1565
  %v1630 = vunpack.c.h.b16 %v1565
  %v1631 = vunpack.c.l.b16 %v1566
  %v1632 = vunpack.c.l.b16 %v1567
  %v1633 = vunpack.c.h.b16 %v1567
  %v1634 = vunpack.c.l.b16 %v1568
  %v1635 = vunpack.c.l.b16 %v1569
  %v1636 = vunpack.c.h.b16 %v1569
  %v1637 = vunpack.c.l.b16 %v1570
  %v1638 = vunpack.c.l.b16 %v1571
  %v1639 = vunpack.c.h.b16 %v1571
  %v1640 = vunpack.c.l.b16 %v1572
  %v1641 = vunpack.c.l.b16 %v1573
  %v1642 = vunpack.c.h.b16 %v1573
  %v1643 = vunpack.c.l.b16 %v1574
  %v1644 = vunpack.c.l.b16 %v1575
  %v1645 = vunpack.c.h.b16 %v1575
  %v1646 = vunpack.c.l.b16 %v1576
  %v1647 = vunpack.c.l.b16 %v1577
  %v1648 = vunpack.c.h.b16 %v1577
  %v1649 = vunpack.c.l.b16 %v1578
  %v1650 = vunpack.c.l.b16 %v1579
  %v1651 = vunpack.c.h.b16 %v1579
  %v1652 = vunpack.c.l.b16 %v1580
  %v1653 = vunpack.c.l.b16 %v1581
  %v1654 = vunpack.c.h.b16 %v1581
  %v1655 = vunpack.c.l.b16 %v1582
  %v1656 = vunpack.c.l.b16 %v1583
  %v1657 = vunpack.c.h.b16 %v1583
  %v1658 = vunpack.c.l.b16 %v1584
  %v1659 = vunpack.c.l.b16 %v1585
  %v1660 = vunpack.c.h.b16 %v1585
  %v1661 = vunpack.c.l.b16 %v1586
  %v1662 = vunpack.c.l.b16 %v1587
  %v1663 = vunpack.c.h.b16 %v1587
  %v1664 = vunpack.c.l.b16 %v1588
  %v1665 = vunpack.c.l.b16 %v1589
  %v1666 = vunpack.c.h.b16 %v1589
  %v1667 = vunpack.c.l.b16 %v1590
  %v1668 = vunpack.c.l.b16 %v1591
  %v1669 = vunpack.c.h.b16 %v1591
  %v1670 = vunpack.c.l.b16 %v1592
  %v1671 = vunpack.c.l.b16 %v1593
  %v1672 = vunpack.c.h.b16 %v1593
  %v1673 = vunpack.c.l.b16 %v1594
  %v1674 = vunpack.c.l.b16 %v1595
  %v1675 = vunpack.c.h.b16 %v1595
  %v1676 = vunpack.c.l.b16 %v1596
  %v1677 = vpack.c.b16 %v1632, %v1629
  %v1678 = vpack.c.b16 %v1633, %v1630
  %v1679 = vpack.c.b16 %v1634, %v1631
  %v1680 = vpack.c.b16 %v1638, %v1635
  %v1681 = vpack.c.b16 %v1639, %v1636
  %v1682 = vpack.c.b16 %v1640, %v1637
  %v1683 = vpack.c.b16 %v1644, %v1641
  %v1684 = vpack.c.b16 %v1645, %v1642
  %v1685 = vpack.c.b16 %v1646, %v1643
  %v1686 = vpack.c.b16 %v1650, %v1647
  %v1687 = vpack.c.b16 %v1651, %v1648
  %v1688 = vpack.c.b16 %v1652, %v1649
  %v1689 = vpack.c.b16 %v1656, %v1653
  %v1690 = vpack.c.b16 %v1657, %v1654
  %v1691 = vpack.c.b16 %v1658, %v1655
  %v1692 = vpack.c.b16 %v1662, %v1659
  %v1693 = vpack.c.b16 %v1663, %v1660
  %v1694 = vpack.c.b16 %v1664, %v1661
  %v1695 = vpack.c.b16 %v1668, %v1665
  %v1696 = vpack.c.b16 %v1669, %v1666
  %v1697 = vpack.c.b16 %v1670, %v1667
  %v1698 = vpack.c.b16 %v1674, %v1671
  %v1699 = vpack.c.b16 %v1675, %v1672
  %v1700 = vpack.c.b16 %v1676, %v1673
  %1725 = vmatpush.bf16.msra.mxu0 %v1698
  %1726 = vmatpush.bf16.msra.mxu0 %v1695
  %1727 = vmatpush.bf16.msra.mxu0 %v1692
  %1728 = vmatpush.bf16.msra.mxu0 %v1689
  %1729 = vmatpush.bf16.msra.mxu0 %v1686
  %1730 = vmatpush.bf16.msra.mxu0 %v1683
  %1731 = vmatpush.bf16.msra.mxu0 %v1680
  %1732 = vmatpush.bf16.msra.mxu0 %v1677
  %1733 = vmatmul.bf16.gmra.mxu0 %v1564
  %v1734 = vpop.f32.mrf.mxu0
  %v1735 = vadd.f32 0.0, %v1734
  %v1736 = vpop.f32.mrf.mxu0
  %1737 = vdwg.mxu0
  %1738 = vmatpush.bf16.msra.mxu0 %v1699
  %1739 = vmatpush.bf16.msra.mxu0 %v1696
  %1740 = vmatpush.bf16.msra.mxu0 %v1693
  %1741 = vmatpush.bf16.msra.mxu0 %v1690
  %1742 = vmatpush.bf16.msra.mxu0 %v1687
  %1743 = vmatpush.bf16.msra.mxu0 %v1684
  %1744 = vmatpush.bf16.msra.mxu0 %v1681
  %1745 = vmatpush.bf16.msra.mxu0 %v1678
  %1746 = vmatmul.bf16.gmra.mxu0 %v1564
  %v1747 = vpop.f32.mrf.mxu0
  %v1748 = vadd.f32 0.0, %v1747
  %v1749 = vpop.f32.mrf.mxu0
  %1750 = vdwg.mxu0
  %1751 = vmatpush.bf16.msra.mxu0 %v1700
  %1752 = vmatpush.bf16.msra.mxu0 %v1697
  %1753 = vmatpush.bf16.msra.mxu0 %v1694
  %1754 = vmatpush.bf16.msra.mxu0 %v1691
  %1755 = vmatpush.bf16.msra.mxu0 %v1688
  %1756 = vmatpush.bf16.msra.mxu0 %v1685
  %1757 = vmatpush.bf16.msra.mxu0 %v1682
  %1758 = vmatpush.bf16.msra.mxu0 %v1679
  %1759 = vmatmul.bf16.gmra.mxu0 %v1564
  %v1760 = vpop.f32.mrf.mxu0
  %v1761 = vadd.f32 0.0, %v1760
  %v1762 = vpop.f32.mrf.mxu0
  %1763 = vdwg.mxu0
  %s1764 = scalar_lea.vmem %s0, 144
  %v1765 = vld [vmem:[%s1764] sm:$0xff]
  %v1766 = vld [vmem:[%s1764 + $0x8] sm:$0xff]
  %v1767 = vld [vmem:[%s1764 + $0x10] sm:$0xff]
  %v1768 = vadd.f32 %v1765, %v1735
  %v1769 = vxor.u32 %v1768, 2147483648
  %v1770 = vmul.f32 %v1769, 1.442695
  %v1771 = vpow.pop %v1770
  %v1772 = vadd.f32 %v1771, 1.0
  %v1773 = vrcp.pop %v1772
  %v1774 = vmul.f32 %v1772, %v1773
  %v1775 = vsub.f32 1.0, %v1774
  %v1776 = vmul.f32 %v1773, %v1775
  %v1777 = vadd.f32 %v1773, %v1776
  %vm1778 = vweird.f32 %v1772
  %vm1779 = vweird.f32 %v1773
  %vm1780 = vmor %vm1778, %vm1779
  %v1781 = vsel %vm1780, %v1773, %v1777
  %v1782 = vand.u32 2147483647, %v1772
  %vm1783 = vcmp.eq.f32.partialorder %v1782, 8.507059e+37
  %v1784 = vand.u32 %v1772, 2147483648
  %v1785 = vor.u32 1.1754944e-38, %v1784
  %v1786 = vsel %vm1783, %v1785, %v1781
  %v1787 = vmul.f32 1.0, %v1786
  %v1788 = vadd.f32 %v1766, %v1748
  %v1789 = vxor.u32 %v1788, 2147483648
  %v1790 = vmul.f32 %v1789, 1.442695
  %v1791 = vpow.pop %v1790
  %v1792 = vadd.f32 %v1791, 1.0
  %v1793 = vrcp.pop %v1792
  %v1794 = vmul.f32 %v1792, %v1793
  %v1795 = vsub.f32 1.0, %v1794
  %v1796 = vmul.f32 %v1793, %v1795
  %v1797 = vadd.f32 %v1793, %v1796
  %vm1798 = vweird.f32 %v1792
  %vm1799 = vweird.f32 %v1793
  %vm1800 = vmor %vm1798, %vm1799
  %v1801 = vsel %vm1800, %v1793, %v1797
  %v1802 = vand.u32 2147483647, %v1792
  %vm1803 = vcmp.eq.f32.partialorder %v1802, 8.507059e+37
  %v1804 = vand.u32 %v1792, 2147483648
  %v1805 = vor.u32 1.1754944e-38, %v1804
  %v1806 = vsel %vm1803, %v1805, %v1801
  %v1807 = vmul.f32 1.0, %v1806
  %v1808 = vld [vmem:[%s3] sm:$0x1]
  %v1810 = vperm.slane %v1808, 0
  %v1812 = vadd.f32 %v1761, %v1810
  %v1813 = vmul.f32 %v1787, %v1812
  %v1814 = vadd.f32 %v1767, %v1813
  %v1815 = vtanh.pop %v1814
  %v1816 = vsub.f32 %v1561, %v1815
  %v1817 = vmul.f32 %v1807, %v1816
  %v1818 = vadd.f32 %v1815, %v1817
  %s1819 = scalar_lea.vmem %s4, 48
  %1820 = vst [vmem:[%s1819] sm:$0xff] %v1818
  %v1821 = vpack.c.bf16 %v1818, %v1818
  %v1822 = vld [vmem:[%s2] sm:$0xff]
  %v1823 = vld [vmem:[%s2 + $0x8] sm:$0xf]
  %v1824 = vld [vmem:[%s2 + $0xc] sm:$0xff]
  %v1825 = vld [vmem:[%s2 + $0x14] sm:$0xf]
  %v1826 = vld [vmem:[%s2 + $0x18] sm:$0xff]
  %v1827 = vld [vmem:[%s2 + $0x20] sm:$0xf]
  %v1828 = vld [vmem:[%s2 + $0x24] sm:$0xff]
  %v1829 = vld [vmem:[%s2 + $0x2c] sm:$0xf]
  %v1830 = vld [vmem:[%s2 + $0x30] sm:$0xff]
  %v1831 = vld [vmem:[%s2 + $0x38] sm:$0xf]
  %v1832 = vld [vmem:[%s2 + $0x3c] sm:$0xff]
  %v1833 = vld [vmem:[%s2 + $0x44] sm:$0xf]
  %v1834 = vld [vmem:[%s2 + $0x48] sm:$0xff]
  %v1835 = vld [vmem:[%s2 + $0x50] sm:$0xf]
  %v1836 = vld [vmem:[%s2 + $0x54] sm:$0xff]
  %v1837 = vld [vmem:[%s2 + $0x5c] sm:$0xf]
  %v1838 = vld [vmem:[%s2 + $0x60] sm:$0xff]
  %v1839 = vld [vmem:[%s2 + $0x68] sm:$0xf]
  %v1840 = vld [vmem:[%s2 + $0x6c] sm:$0xff]
  %v1841 = vld [vmem:[%s2 + $0x74] sm:$0xf]
  %v1842 = vld [vmem:[%s2 + $0x78] sm:$0xff]
  %v1843 = vld [vmem:[%s2 + $0x80] sm:$0xf]
  %v1844 = vld [vmem:[%s2 + $0x84] sm:$0xff]
  %v1845 = vld [vmem:[%s2 + $0x8c] sm:$0xf]
  %v1846 = vld [vmem:[%s2 + $0x90] sm:$0xff]
  %v1847 = vld [vmem:[%s2 + $0x98] sm:$0xf]
  %v1848 = vld [vmem:[%s2 + $0x9c] sm:$0xff]
  %v1849 = vld [vmem:[%s2 + $0xa4] sm:$0xf]
  %v1850 = vld [vmem:[%s2 + $0xa8] sm:$0xff]
  %v1851 = vld [vmem:[%s2 + $0xb0] sm:$0xf]
  %v1852 = vld [vmem:[%s2 + $0xb4] sm:$0xff]
  %v1853 = vld [vmem:[%s2 + $0xbc] sm:$0xf]
  %v1886 = vunpack.c.l.b16 %v1822
  %v1887 = vunpack.c.h.b16 %v1822
  %v1888 = vunpack.c.l.b16 %v1823
  %v1889 = vunpack.c.l.b16 %v1824
  %v1890 = vunpack.c.h.b16 %v1824
  %v1891 = vunpack.c.l.b16 %v1825
  %v1892 = vunpack.c.l.b16 %v1826
  %v1893 = vunpack.c.h.b16 %v1826
  %v1894 = vunpack.c.l.b16 %v1827
  %v1895 = vunpack.c.l.b16 %v1828
  %v1896 = vunpack.c.h.b16 %v1828
  %v1897 = vunpack.c.l.b16 %v1829
  %v1898 = vunpack.c.l.b16 %v1830
  %v1899 = vunpack.c.h.b16 %v1830
  %v1900 = vunpack.c.l.b16 %v1831
  %v1901 = vunpack.c.l.b16 %v1832
  %v1902 = vunpack.c.h.b16 %v1832
  %v1903 = vunpack.c.l.b16 %v1833
  %v1904 = vunpack.c.l.b16 %v1834
  %v1905 = vunpack.c.h.b16 %v1834
  %v1906 = vunpack.c.l.b16 %v1835
  %v1907 = vunpack.c.l.b16 %v1836
  %v1908 = vunpack.c.h.b16 %v1836
  %v1909 = vunpack.c.l.b16 %v1837
  %v1910 = vunpack.c.l.b16 %v1838
  %v1911 = vunpack.c.h.b16 %v1838
  %v1912 = vunpack.c.l.b16 %v1839
  %v1913 = vunpack.c.l.b16 %v1840
  %v1914 = vunpack.c.h.b16 %v1840
  %v1915 = vunpack.c.l.b16 %v1841
  %v1916 = vunpack.c.l.b16 %v1842
  %v1917 = vunpack.c.h.b16 %v1842
  %v1918 = vunpack.c.l.b16 %v1843
  %v1919 = vunpack.c.l.b16 %v1844
  %v1920 = vunpack.c.h.b16 %v1844
  %v1921 = vunpack.c.l.b16 %v1845
  %v1922 = vunpack.c.l.b16 %v1846
  %v1923 = vunpack.c.h.b16 %v1846
  %v1924 = vunpack.c.l.b16 %v1847
  %v1925 = vunpack.c.l.b16 %v1848
  %v1926 = vunpack.c.h.b16 %v1848
  %v1927 = vunpack.c.l.b16 %v1849
  %v1928 = vunpack.c.l.b16 %v1850
  %v1929 = vunpack.c.h.b16 %v1850
  %v1930 = vunpack.c.l.b16 %v1851
  %v1931 = vunpack.c.l.b16 %v1852
  %v1932 = vunpack.c.h.b16 %v1852
  %v1933 = vunpack.c.l.b16 %v1853
  %v1934 = vpack.c.b16 %v1889, %v1886
  %v1935 = vpack.c.b16 %v1890, %v1887
  %v1936 = vpack.c.b16 %v1891, %v1888
  %v1937 = vpack.c.b16 %v1895, %v1892
  %v1938 = vpack.c.b16 %v1896, %v1893
  %v1939 = vpack.c.b16 %v1897, %v1894
  %v1940 = vpack.c.b16 %v1901, %v1898
  %v1941 = vpack.c.b16 %v1902, %v1899
  %v1942 = vpack.c.b16 %v1903, %v1900
  %v1943 = vpack.c.b16 %v1907, %v1904
  %v1944 = vpack.c.b16 %v1908, %v1905
  %v1945 = vpack.c.b16 %v1909, %v1906
  %v1946 = vpack.c.b16 %v1913, %v1910
  %v1947 = vpack.c.b16 %v1914, %v1911
  %v1948 = vpack.c.b16 %v1915, %v1912
  %v1949 = vpack.c.b16 %v1919, %v1916
  %v1950 = vpack.c.b16 %v1920, %v1917
  %v1951 = vpack.c.b16 %v1921, %v1918
  %v1952 = vpack.c.b16 %v1925, %v1922
  %v1953 = vpack.c.b16 %v1926, %v1923
  %v1954 = vpack.c.b16 %v1927, %v1924
  %v1955 = vpack.c.b16 %v1931, %v1928
  %v1956 = vpack.c.b16 %v1932, %v1929
  %v1957 = vpack.c.b16 %v1933, %v1930
  %1982 = vmatpush.bf16.msra.mxu0 %v1955
  %1983 = vmatpush.bf16.msra.mxu0 %v1952
  %1984 = vmatpush.bf16.msra.mxu0 %v1949
  %1985 = vmatpush.bf16.msra.mxu0 %v1946
  %1986 = vmatpush.bf16.msra.mxu0 %v1943
  %1987 = vmatpush.bf16.msra.mxu0 %v1940
  %1988 = vmatpush.bf16.msra.mxu0 %v1937
  %1989 = vmatpush.bf16.msra.mxu0 %v1934
  %1990 = vmatmul.bf16.gmra.mxu0 %v1821
  %v1991 = vpop.f32.mrf.mxu0
  %v1992 = vadd.f32 0.0, %v1991
  %v1993 = vpop.f32.mrf.mxu0
  %1994 = vdwg.mxu0
  %1995 = vmatpush.bf16.msra.mxu0 %v1956
  %1996 = vmatpush.bf16.msra.mxu0 %v1953
  %1997 = vmatpush.bf16.msra.mxu0 %v1950
  %1998 = vmatpush.bf16.msra.mxu0 %v1947
  %1999 = vmatpush.bf16.msra.mxu0 %v1944
  %2000 = vmatpush.bf16.msra.mxu0 %v1941
  %2001 = vmatpush.bf16.msra.mxu0 %v1938
  %2002 = vmatpush.bf16.msra.mxu0 %v1935
  %2003 = vmatmul.bf16.gmra.mxu0 %v1821
  %v2004 = vpop.f32.mrf.mxu0
  %v2005 = vadd.f32 0.0, %v2004
  %v2006 = vpop.f32.mrf.mxu0
  %2007 = vdwg.mxu0
  %2008 = vmatpush.bf16.msra.mxu0 %v1957
  %2009 = vmatpush.bf16.msra.mxu0 %v1954
  %2010 = vmatpush.bf16.msra.mxu0 %v1951
  %2011 = vmatpush.bf16.msra.mxu0 %v1948
  %2012 = vmatpush.bf16.msra.mxu0 %v1945
  %2013 = vmatpush.bf16.msra.mxu0 %v1942
  %2014 = vmatpush.bf16.msra.mxu0 %v1939
  %2015 = vmatpush.bf16.msra.mxu0 %v1936
  %2016 = vmatmul.bf16.gmra.mxu0 %v1821
  %v2017 = vpop.f32.mrf.mxu0
  %v2018 = vadd.f32 0.0, %v2017
  %v2019 = vpop.f32.mrf.mxu0
  %2020 = vdwg.mxu0
  %s2021 = scalar_lea.vmem %s0, 168
  %v2022 = vld [vmem:[%s2021] sm:$0xff]
  %v2023 = vld [vmem:[%s2021 + $0x8] sm:$0xff]
  %v2024 = vld [vmem:[%s2021 + $0x10] sm:$0xff]
  %v2025 = vadd.f32 %v2022, %v1992
  %v2026 = vxor.u32 %v2025, 2147483648
  %v2027 = vmul.f32 %v2026, 1.442695
  %v2028 = vpow.pop %v2027
  %v2029 = vadd.f32 %v2028, 1.0
  %v2030 = vrcp.pop %v2029
  %v2031 = vmul.f32 %v2029, %v2030
  %v2032 = vsub.f32 1.0, %v2031
  %v2033 = vmul.f32 %v2030, %v2032
  %v2034 = vadd.f32 %v2030, %v2033
  %vm2035 = vweird.f32 %v2029
  %vm2036 = vweird.f32 %v2030
  %vm2037 = vmor %vm2035, %vm2036
  %v2038 = vsel %vm2037, %v2030, %v2034
  %v2039 = vand.u32 2147483647, %v2029
  %vm2040 = vcmp.eq.f32.partialorder %v2039, 8.507059e+37
  %v2041 = vand.u32 %v2029, 2147483648
  %v2042 = vor.u32 1.1754944e-38, %v2041
  %v2043 = vsel %vm2040, %v2042, %v2038
  %v2044 = vmul.f32 1.0, %v2043
  %v2045 = vadd.f32 %v2023, %v2005
  %v2046 = vxor.u32 %v2045, 2147483648
  %v2047 = vmul.f32 %v2046, 1.442695
  %v2048 = vpow.pop %v2047
  %v2049 = vadd.f32 %v2048, 1.0
  %v2050 = vrcp.pop %v2049
  %v2051 = vmul.f32 %v2049, %v2050
  %v2052 = vsub.f32 1.0, %v2051
  %v2053 = vmul.f32 %v2050, %v2052
  %v2054 = vadd.f32 %v2050, %v2053
  %vm2055 = vweird.f32 %v2049
  %vm2056 = vweird.f32 %v2050
  %vm2057 = vmor %vm2055, %vm2056
  %v2058 = vsel %vm2057, %v2050, %v2054
  %v2059 = vand.u32 2147483647, %v2049
  %vm2060 = vcmp.eq.f32.partialorder %v2059, 8.507059e+37
  %v2061 = vand.u32 %v2049, 2147483648
  %v2062 = vor.u32 1.1754944e-38, %v2061
  %v2063 = vsel %vm2060, %v2062, %v2058
  %v2064 = vmul.f32 1.0, %v2063
  %v2065 = vld [vmem:[%s3] sm:$0x1]
  %v2067 = vperm.slane %v2065, 0
  %v2069 = vadd.f32 %v2018, %v2067
  %v2070 = vmul.f32 %v2044, %v2069
  %v2071 = vadd.f32 %v2024, %v2070
  %v2072 = vtanh.pop %v2071
  %v2073 = vsub.f32 %v1818, %v2072
  %v2074 = vmul.f32 %v2064, %v2073
  %v2075 = vadd.f32 %v2072, %v2074
  %s2076 = scalar_lea.vmem %s4, 56
  %2077 = vst [vmem:[%s2076] sm:$0xff] %v2075
  %2078 = vst [vmem:[#allocation2] sm:$0xff] %v2075
  // Predicated region
  $region22: #{seq2seq_forward.6} parent=0 // pred_check
    _
  $region23: #{seq2seq_forward.6} parent=0 // pred_check_branch
    %2080 = sbr.rel (0) target = $region25
  $region24: #{seq2seq_forward.6} parent=0 // pred_region
    _
  $region25: #{seq2seq_forward.6} parent=0 // pred_fallthru
    _
  // Predicated region
  $region26: #{seq2seq_forward.6} parent=0 // pred_check
    _
  $region27: #{seq2seq_forward.6} parent=0 // pred_check_branch
    %2082 = sbr.rel (0) target = $region29
  $region28: #{seq2seq_forward.6} parent=0 // pred_region
    _
  $region29: #{seq2seq_forward.6} parent=0 // pred_fallthru
    _

</llo_original>
